<compile_context>
chip_gen: v6e
topology: v6e:2x2x1
jax: 0.10.0
libtpu: 0.0.40
codegen_flags: <defaults>
</compile_context>

<pallas_src>
import numpy as np
import jax
import jax.numpy as jnp
from jax.experimental import pallas as pl
from jax.experimental.pallas import tpu as pltpu

OUT_PAD = 128  # lane-dense output slab width; first 10 lanes carry pos(3)|rot(6)|open(1)


# ----------------------------------------------------------------------------
# DDPM scheduler tables (exact diffusers semantics for add_noise, float32 cumprod)
# ----------------------------------------------------------------------------
def make_alphas_cumprod(num_train_timesteps, beta_schedule,
                        beta_start=0.0001, beta_end=0.02):
    if beta_schedule == "scaled_linear":
        betas = np.linspace(beta_start ** 0.5, beta_end ** 0.5,
                            num_train_timesteps, dtype=np.float32) ** 2
    elif beta_schedule == "squaredcos_cap_v2":
        def alpha_bar(t):
            return np.cos((t + 0.008) / 1.008 * np.pi / 2) ** 2
        i = np.arange(num_train_timesteps, dtype=np.float64)
        t1 = i / num_train_timesteps
        t2 = (i + 1) / num_train_timesteps
        betas = np.minimum(1.0 - alpha_bar(t2) / alpha_bar(t1), 0.999).astype(np.float32)
    else:
        raise ValueError(beta_schedule)
    alphas = (1.0 - betas).astype(np.float32)
    return np.cumprod(alphas, dtype=np.float32)      # float32 accumulation (diffusers)


# ----------------------------------------------------------------------------
# Fused kernel: kp-encoder + timestep embedding + DDPM add_noise + prediction head
# ----------------------------------------------------------------------------
def _make_fused_kernel(B, T, n_kp, E):
    def kernel(ts_ref,                                   # scalar prefetch (SMEM): (B,) int32
               kpf_ref, kpx_ref, gt_ref, nz_ref,         # (B*n_kp,F) (B*n_kp,3) (B*T,9) (B*T,9)
               ttab_ref,                                  # (nT, E+18): [tsin | c1 | c2], resident
               kp_w1f, kp_w1x, kp_w2,                     # keypoint encoder weights
               t_w1, t_w2,                                # timestep MLP weights
               in_w, conv_w, out_w,                       # input proj + temporal conv + head
               b_small, b_wide,                           # packed bias slabs
               o_ref):                                    # (B*T, OUT_PAD)
        f32 = jnp.float32

        def softplus(v):
            return jnp.log1p(jnp.exp(-jnp.abs(v))) + jnp.maximum(v, 0.0)

        def mish(v):
            return v * jnp.tanh(softplus(v))

        # ---- unpack bias slabs (one DMA each instead of 7 tiny ones) ----
        bs = b_small[...]                                  # (8, E)
        kp_b1 = bs[0:1, :]
        kp_b2 = bs[1:2, :]
        t_b2 = bs[2:3, :]
        in_b = bs[3:4, :]
        conv_b = bs[4:5, :]
        bw = b_wide[...]                                   # (2, max(4E, OUT_PAD))
        t_b1 = bw[0:1, :4 * E]
        out_b = bw[1:2, :OUT_PAD]

        # ---- per-batch row gathers from the single resident table ----
        tsin_rows, c1_rows, c2_rows = [], [], []
        for b in range(B):
            t = ts_ref[b]                                  # SMEM scalar timestep
            row = ttab_ref[pl.ds(t, 1), :]                 # (1, E+18), dynamic sublane offset
            tsin_rows.append(row[:, :E])
            c1_rows.append(row[:, E:E + 9])
            c2_rows.append(row[:, E + 9:E + 18])
        tsin = jnp.concatenate(tsin_rows, axis=0)          # (B, E)

        # ---- timestep MLP, batched over B ----
        temb = mish(jnp.dot(tsin, t_w1[...], preferred_element_type=f32) + t_b1)
        temb = jnp.dot(temb, t_w2[...], preferred_element_type=f32) + t_b2      # (B, E)

        # ---- keypoint encoder, batched over B*n_kp (split weight -> no 67-lane concat) ----
        h = (jnp.dot(kpf_ref[...], kp_w1f[...], preferred_element_type=f32)
             + jnp.dot(kpx_ref[...], kp_w1x[...], preferred_element_type=f32)
             + kp_b1)                                      # (B*n_kp, E)
        h = jnp.maximum(h, 0.0)
        kp_emb = jnp.dot(h, kp_w2[...], preferred_element_type=f32) + kp_b2     # (B*n_kp, E)
        kp_pool = jnp.concatenate(
            [jnp.mean(kp_emb[b * n_kp:(b + 1) * n_kp, :], axis=0, keepdims=True)
             for b in range(B)], axis=0)                   # (B, E)

        cond = temb + kp_pool                              # (B, E)

        # ---- DDPM add_noise: both schedulers as one 9-lane FMA over the folded batch ----
        c1_full = jnp.concatenate(
            [jnp.broadcast_to(c1_rows[b], (T, 9)) for b in range(B)], axis=0)    # (B*T, 9)
        c2_full = jnp.concatenate(
            [jnp.broadcast_to(c2_rows[b], (T, 9)) for b in range(B)], axis=0)
        noisy = c1_full * gt_ref[...] + c2_full * nz_ref[...]                    # (B*T, 9)

        # ---- input projection + per-batch conditioning broadcast over time ----
        cond_full = jnp.concatenate(
            [jnp.broadcast_to(cond[b:b + 1, :], (T, E)) for b in range(B)], axis=0)
        x = (jnp.dot(noisy, in_w[...], preferred_element_type=f32)
             + in_b + cond_full)                            # (B*T, E)

        # ---- temporal conv (k=3, same padding) via sublane roll + boundary masks ----
        BT = B * T
        pos = jax.lax.broadcasted_iota(jnp.int32, (BT, 1), 0) % T   # row index within traj
        x_prev = jnp.where(pos == 0, 0.0, pltpu.roll(x, 1, axis=0))
        x_next = jnp.where(pos == T - 1, 0.0, pltpu.roll(x, BT - 1, axis=0))
        cw = conv_w[...]                                    # (3E, E): [w_prev; w_center; w_next]
        hc = (jnp.dot(x_prev, cw[0:E, :], preferred_element_type=f32)
              + jnp.dot(x, cw[E:2 * E, :], preferred_element_type=f32)
              + jnp.dot(x_next, cw[2 * E:3 * E, :], preferred_element_type=f32)
              + conv_b)
        hc = mish(hc) + x

        # ---- output head: lane-dense (B*T, 128) slab; first 10 lanes are pos|rot|open ----
        o_ref[...] = jnp.dot(hc, out_w[...], preferred_element_type=f32) + out_b

    return kernel


# ----------------------------------------------------------------------------
# KalmDiffuser (JAX wrapper)
# ----------------------------------------------------------------------------
class KalmDiffuserPallas:
    def __init__(self, key, unet_embedding_dim=32, diffusion_timesteps=100,
                 traj_len=16, n_kp=8, kp_feat_dim=64):
        self.diffusion_steps = diffusion_timesteps
        self.traj_len = traj_len
        self.emb_dim = unet_embedding_dim
        self.n_kp = n_kp
        self.kp_feat_dim = kp_feat_dim

        E = unet_embedding_dim
        nT = diffusion_timesteps

        # ---- host-precomputed (nT, E+18) table: [sinusoid(t) | c1(t) | c2(t)] ----
        acp_pos = make_alphas_cumprod(nT, "scaled_linear")
        acp_rot = make_alphas_cumprod(nT, "squaredcos_cap_v2")
        c1_pos = np.sqrt(acp_pos)
        c2_pos = np.sqrt((1.0 - acp_pos).astype(np.float32))
        c1_rot = np.sqrt(acp_rot)
        c2_rot = np.sqrt((1.0 - acp_rot).astype(np.float32))
        c1 = np.concatenate([np.tile(c1_pos[:, None], (1, 3)),
                             np.tile(c1_rot[:, None], (1, 6))], axis=-1)   # (nT, 9)
        c2 = np.concatenate([np.tile(c2_pos[:, None], (1, 3)),
                             np.tile(c2_rot[:, None], (1, 6))], axis=-1)   # (nT, 9)

        half = E // 2
        freqs = np.exp(-np.log(10000.0) * np.arange(half, dtype=np.float64) / half)
        args = np.arange(nT, dtype=np.float64)[:, None] * freqs[None, :]
        tsin = np.concatenate([np.sin(args), np.cos(args)], axis=-1)        # (nT, E)

        self.ttab = jnp.asarray(
            np.concatenate([tsin, c1, c2], axis=-1).astype(np.float32))     # (nT, E+18)

        # ---- weights ----
        ks = jax.random.split(key, 10)

        def lin(k, i, o):
            return (jax.random.normal(k, (i, o), jnp.float32) / np.sqrt(i)).astype(jnp.float32)

        out_w = lin(ks[9], E, 10)
        out_w_pad = jnp.zeros((E, OUT_PAD), jnp.float32).at[:, :10].set(out_w)

        wide = max(4 * E, OUT_PAD)
        self.params = {
            "kp_w1f": lin(ks[0], kp_feat_dim, E),     # feat part of kp_w1
            "kp_w1x": lin(ks[1], 3, E),               # xyz part of kp_w1
            "kp_w2": lin(ks[2], E, E),
            "t_w1": lin(ks[3], E, 4 * E),
            "t_w2": lin(ks[4], 4 * E, E),
            "in_w": lin(ks[5], 9, E),
            # temporal conv weights pre-stacked [w_prev; w_center; w_next] -> (3E, E)
            "conv_w": lin(ks[6], 3 * E, E),
            "out_w": out_w_pad,
            # packed bias slabs: rows 0..4 = kp_b1,kp_b2,t_b2,in_b,conv_b (zero-init)
            "b_small": jnp.zeros((8, E), jnp.float32),
            # row 0 = t_b1 (first 4E lanes), row 1 = out_b (first OUT_PAD lanes)
            "b_wide": jnp.zeros((2, wide), jnp.float32),
        }
        self._forward_jit = jax.jit(self._forward_impl)

    # ------------------------------------------------------------------
    def _fused_call(self, timesteps, keypoints_feat, keypoints_xyz, gt9, noise):
        B, T, _ = gt9.shape
        n_kp, F, E = self.n_kp, self.kp_feat_dim, self.emb_dim
        nT = self.diffusion_steps
        p = self.params
        wide = p["b_wide"].shape[1]

        # fold batch into the sublane dim (metadata-only reshapes; trailing dim unchanged)
        kpf2 = keypoints_feat.reshape(B * n_kp, F)
        kpx2 = keypoints_xyz.reshape(B * n_kp, 3)
        gt2 = gt9.reshape(B * T, 9)
        nz2 = noise.reshape(B * T, 9)

        full = lambda shape: pl.BlockSpec(shape, lambda i, ts: (0,) * len(shape))

        grid_spec = pltpu.PrefetchScalarGridSpec(
            num_scalar_prefetch=1,           # timesteps -> SMEM scalars
            grid=(1,),                       # single step: everything resident, one DMA round
            in_specs=[
                full((B * n_kp, F)),
                full((B * n_kp, 3)),
                full((B * T, 9)),
                full((B * T, 9)),
                full((nT, E + 18)),          # resident sinusoid/coeff table (no per-step gathers)
                full((F, E)),
                full((3, E)),
                full((E, E)),
                full((E, 4 * E)),
                full((4 * E, E)),
                full((9, E)),
                full((3 * E, E)),
                full((E, OUT_PAD)),
                full((8, E)),
                full((2, wide)),
            ],
            out_specs=full((B * T, OUT_PAD)),
        )

        kernel = _make_fused_kernel(B, T, n_kp, E)
        out = pl.pallas_call(
            kernel,
            out_shape=jax.ShapeDtypeStruct((B * T, OUT_PAD), jnp.float32),
            grid_spec=grid_spec,
            compiler_params=pltpu.CompilerParams(
                dimension_semantics=("arbitrary",),
                vmem_limit_bytes=32 * 1024 * 1024),   # modest; footprint is well under 1 MiB
        )(timesteps, kpf2, kpx2, gt2, nz2, self.ttab,
          p["kp_w1f"], p["kp_w1x"], p["kp_w2"], p["t_w1"], p["t_w2"],
          p["in_w"], p["conv_w"], p["out_w"], p["b_small"], p["b_wide"])

        return out.reshape(B, T, OUT_PAD)

    # ------------------------------------------------------------------
    def _forward_impl(self, keypoints_feat, keypoints_xyz, gt_trajectory, rng):
        B = gt_trajectory.shape[0]
        k_t, k_n = jax.random.split(rng)
        timesteps = jax.random.randint(k_t, (B,), 0, self.diffusion_steps,
                                       dtype=jnp.int32)
        gt9 = gt_trajectory[..., :9]
        noise_9d = jax.random.normal(k_n, gt9.shape, jnp.float32)

        out = self._fused_call(timesteps, keypoints_feat, keypoints_xyz, gt9, noise_9d)

        pred_dict = {
            "position": out[..., 0:3],
            "rotation": out[..., 3:9],
            "openess": out[..., 9:10],
            "trajectory_10d": out[..., :10],
        }
        return noise_9d, pred_dict

    def forward(self, keypoints_feat, keypoints_xyz, gt_trajectory, rng):
        return self._forward_jit(keypoints_feat, keypoints_xyz, gt_trajectory, rng)


if __name__ == "__main__":
    key = jax.random.PRNGKey(0)
    k_param, k_feat, k_xyz, k_traj, k_fwd = jax.random.split(key, 5)

    B, n_kp, kp_feat_dim, traj_len, emb_dim = 2, 8, 64, 16, 32
    model = KalmDiffuserPallas(k_param, unet_embedding_dim=emb_dim,
                               diffusion_timesteps=100, traj_len=traj_len,
                               n_kp=n_kp, kp_feat_dim=kp_feat_dim)

    keypoints_feat = jax.random.normal(k_feat, (B, n_kp, kp_feat_dim), jnp.float32)
    keypoints_xyz = jax.random.normal(k_xyz, (B, n_kp, 3), jnp.float32)
    gt_trajectory = jax.random.normal(k_traj, (B, traj_len, 10), jnp.float32)

    noise_9d, pred_dict = model.forward(keypoints_feat, keypoints_xyz,
                                        gt_trajectory, k_fwd)
    jax.block_until_ready(noise_9d)
    jax.block_until_ready(pred_dict["trajectory_10d"])

    assert noise_9d.shape == (B, traj_len, 9)
    assert pred_dict["position"].shape == (B, traj_len, 3)
    assert pred_dict["rotation"].shape == (B, traj_len, 6)
    assert pred_dict["openess"].shape == (B, traj_len, 1)
    assert bool(jnp.all(jnp.isfinite(pred_dict["trajectory_10d"])))
    print("KERNEL_OK")
</pallas_src>

<mosaic_0001>
module attributes {stable_mosaic.version = 11 : i64} {
  func.func @kernel(%arg0: i32, %arg1: memref<2xi32, #tpu.memory_space<smem>>, %arg2: memref<16x64xf32, #tpu.memory_space<vmem>>, %arg3: memref<16x3xf32, #tpu.memory_space<vmem>>, %arg4: memref<32x9xf32, #tpu.memory_space<vmem>>, %arg5: memref<32x9xf32, #tpu.memory_space<vmem>>, %arg6: memref<100x50xf32, #tpu.memory_space<vmem>>, %arg7: memref<64x32xf32, #tpu.memory_space<vmem>>, %arg8: memref<3x32xf32, #tpu.memory_space<vmem>>, %arg9: memref<32x32xf32, #tpu.memory_space<vmem>>, %arg10: memref<32x128xf32, #tpu.memory_space<vmem>>, %arg11: memref<128x32xf32, #tpu.memory_space<vmem>>, %arg12: memref<9x32xf32, #tpu.memory_space<vmem>>, %arg13: memref<96x32xf32, #tpu.memory_space<vmem>>, %arg14: memref<32x128xf32, #tpu.memory_space<vmem>>, %arg15: memref<8x32xf32, #tpu.memory_space<vmem>>, %arg16: memref<2x128xf32, #tpu.memory_space<vmem>>, %arg17: memref<32x128xf32, #tpu.memory_space<vmem>>) attributes {dimension_semantics = [#tpu.dimension_semantics<arbitrary>], iteration_bounds = array<i64: 1>, scalar_prefetch = 1 : i64, scratch_operands = 0 : i64, tpu.core_type = #tpu.core_type<tc>, window_params = [{pipeline_mode = #tpu.pipeline_mode<synchronous>, transform_indices = @transform_0, window_bounds = array<i64: 16, 64>}, {pipeline_mode = #tpu.pipeline_mode<synchronous>, transform_indices = @transform_1, window_bounds = array<i64: 16, 3>}, {pipeline_mode = #tpu.pipeline_mode<synchronous>, transform_indices = @transform_2, window_bounds = array<i64: 32, 9>}, {pipeline_mode = #tpu.pipeline_mode<synchronous>, transform_indices = @transform_3, window_bounds = array<i64: 32, 9>}, {pipeline_mode = #tpu.pipeline_mode<synchronous>, transform_indices = @transform_4, window_bounds = array<i64: 100, 50>}, {pipeline_mode = #tpu.pipeline_mode<synchronous>, transform_indices = @transform_5, window_bounds = array<i64: 64, 32>}, {pipeline_mode = #tpu.pipeline_mode<synchronous>, transform_indices = @transform_6, window_bounds = array<i64: 3, 32>}, {pipeline_mode = #tpu.pipeline_mode<synchronous>, transform_indices = @transform_7, window_bounds = array<i64: 32, 32>}, {pipeline_mode = #tpu.pipeline_mode<synchronous>, transform_indices = @transform_8, window_bounds = array<i64: 32, 128>}, {pipeline_mode = #tpu.pipeline_mode<synchronous>, transform_indices = @transform_9, window_bounds = array<i64: 128, 32>}, {pipeline_mode = #tpu.pipeline_mode<synchronous>, transform_indices = @transform_10, window_bounds = array<i64: 9, 32>}, {pipeline_mode = #tpu.pipeline_mode<synchronous>, transform_indices = @transform_11, window_bounds = array<i64: 96, 32>}, {pipeline_mode = #tpu.pipeline_mode<synchronous>, transform_indices = @transform_12, window_bounds = array<i64: 32, 128>}, {pipeline_mode = #tpu.pipeline_mode<synchronous>, transform_indices = @transform_13, window_bounds = array<i64: 8, 32>}, {pipeline_mode = #tpu.pipeline_mode<synchronous>, transform_indices = @transform_14, window_bounds = array<i64: 2, 128>}, {pipeline_mode = #tpu.pipeline_mode<synchronous>, transform_indices = @transform_15, window_bounds = array<i64: 32, 128>}]} {
    %c0 = arith.constant 0 : index
    %c0_0 = arith.constant 0 : index
    %0 = vector.load %arg15[%c0, %c0_0] : memref<8x32xf32, #tpu.memory_space<vmem>>, vector<8x32xf32>
    %1 = vector.extract_strided_slice %0 {offsets = [0, 0], sizes = [1, 32], strides = [1, 1]} : vector<8x32xf32> to vector<1x32xf32>
    %2 = vector.extract_strided_slice %0 {offsets = [1, 0], sizes = [1, 32], strides = [1, 1]} : vector<8x32xf32> to vector<1x32xf32>
    %3 = vector.extract_strided_slice %0 {offsets = [2, 0], sizes = [1, 32], strides = [1, 1]} : vector<8x32xf32> to vector<1x32xf32>
    %4 = vector.extract_strided_slice %0 {offsets = [3, 0], sizes = [1, 32], strides = [1, 1]} : vector<8x32xf32> to vector<1x32xf32>
    %5 = vector.extract_strided_slice %0 {offsets = [4, 0], sizes = [1, 32], strides = [1, 1]} : vector<8x32xf32> to vector<1x32xf32>
    %c0_1 = arith.constant 0 : index
    %c0_2 = arith.constant 0 : index
    %6 = vector.load %arg16[%c0_1, %c0_2] : memref<2x128xf32, #tpu.memory_space<vmem>>, vector<2x128xf32>
    %7 = vector.extract_strided_slice %6 {offsets = [0, 0], sizes = [1, 128], strides = [1, 1]} : vector<2x128xf32> to vector<1x128xf32>
    %8 = vector.extract_strided_slice %6 {offsets = [1, 0], sizes = [1, 128], strides = [1, 1]} : vector<2x128xf32> to vector<1x128xf32>
    %c0_3 = arith.constant 0 : index
    %9 = memref.load %arg1[%c0_3] : memref<2xi32, #tpu.memory_space<smem>>
    %10 = arith.index_cast %9 : i32 to index
    %c0_4 = arith.constant 0 : index
    %11 = vector.load %arg6[%10, %c0_4] : memref<100x50xf32, #tpu.memory_space<vmem>>, vector<1x50xf32>
    %12 = vector.extract_strided_slice %11 {offsets = [0, 0], sizes = [1, 32], strides = [1, 1]} : vector<1x50xf32> to vector<1x32xf32>
    %13 = vector.extract_strided_slice %11 {offsets = [0, 32], sizes = [1, 9], strides = [1, 1]} : vector<1x50xf32> to vector<1x9xf32>
    %14 = vector.extract_strided_slice %11 {offsets = [0, 41], sizes = [1, 9], strides = [1, 1]} : vector<1x50xf32> to vector<1x9xf32>
    %c1 = arith.constant 1 : index
    %15 = memref.load %arg1[%c1] : memref<2xi32, #tpu.memory_space<smem>>
    %16 = arith.index_cast %15 : i32 to index
    %c0_5 = arith.constant 0 : index
    %17 = vector.load %arg6[%16, %c0_5] : memref<100x50xf32, #tpu.memory_space<vmem>>, vector<1x50xf32>
    %18 = vector.extract_strided_slice %17 {offsets = [0, 0], sizes = [1, 32], strides = [1, 1]} : vector<1x50xf32> to vector<1x32xf32>
    %19 = vector.extract_strided_slice %17 {offsets = [0, 32], sizes = [1, 9], strides = [1, 1]} : vector<1x50xf32> to vector<1x9xf32>
    %20 = vector.extract_strided_slice %17 {offsets = [0, 41], sizes = [1, 9], strides = [1, 1]} : vector<1x50xf32> to vector<1x9xf32>
    %21 = tpu.concatenate %12, %18 in 0 : vector<1x32xf32>, vector<1x32xf32> -> vector<2x32xf32>
    %c0_6 = arith.constant 0 : index
    %c0_7 = arith.constant 0 : index
    %22 = vector.load %arg10[%c0_6, %c0_7] : memref<32x128xf32, #tpu.memory_space<vmem>>, vector<32x128xf32>
    %cst = arith.constant dense<0.000000e+00> : vector<2x128xf32>
    %23 = tpu.matmul %21, %22, %cst {dimension_numbers = #tpu.dot_dimension_numbers<[1], [0], [0], [1], [0, 0, 1, 1], [], []>} : vector<2x32xf32>, vector<32x128xf32>, vector<2x128xf32> -> vector<2x128xf32>
    %24 = vector.broadcast %7 : vector<1x128xf32> to vector<2x128xf32>
    %25 = arith.addf %23, %24 : vector<2x128xf32>
    %26 = math.absf %25 : vector<2x128xf32>
    %cst_8 = arith.constant 0.000000e+00 : f32
    %27 = vector.broadcast %cst_8 : f32 to vector<2x128xf32>
    %28 = arith.subf %27, %26 : vector<2x128xf32>
    %29 = math.exp %28 : vector<2x128xf32>
    %30 = math.log1p %29 : vector<2x128xf32>
    %cst_9 = arith.constant 0.000000e+00 : f32
    %31 = vector.broadcast %cst_9 : f32 to vector<2x128xf32>
    %32 = arith.maximumf %25, %31 : vector<2x128xf32>
    %33 = arith.addf %30, %32 : vector<2x128xf32>
    %34 = math.tanh %33 : vector<2x128xf32>
    %35 = arith.mulf %25, %34 : vector<2x128xf32>
    %c0_10 = arith.constant 0 : index
    %c0_11 = arith.constant 0 : index
    %36 = vector.load %arg11[%c0_10, %c0_11] : memref<128x32xf32, #tpu.memory_space<vmem>>, vector<128x32xf32>
    %cst_12 = arith.constant dense<0.000000e+00> : vector<2x32xf32>
    %37 = tpu.matmul %35, %36, %cst_12 {dimension_numbers = #tpu.dot_dimension_numbers<[1], [0], [0], [1], [0, 0, 1, 1], [], []>} : vector<2x128xf32>, vector<128x32xf32>, vector<2x32xf32> -> vector<2x32xf32>
    %38 = vector.broadcast %3 : vector<1x32xf32> to vector<2x32xf32>
    %39 = arith.addf %37, %38 : vector<2x32xf32>
    %c0_13 = arith.constant 0 : index
    %c0_14 = arith.constant 0 : index
    %40 = vector.load %arg2[%c0_13, %c0_14] : memref<16x64xf32, #tpu.memory_space<vmem>>, vector<16x64xf32>
    %c0_15 = arith.constant 0 : index
    %c0_16 = arith.constant 0 : index
    %41 = vector.load %arg7[%c0_15, %c0_16] : memref<64x32xf32, #tpu.memory_space<vmem>>, vector<64x32xf32>
    %cst_17 = arith.constant dense<0.000000e+00> : vector<16x32xf32>
    %42 = tpu.matmul %40, %41, %cst_17 {dimension_numbers = #tpu.dot_dimension_numbers<[1], [0], [0], [1], [0, 0, 1, 1], [], []>} : vector<16x64xf32>, vector<64x32xf32>, vector<16x32xf32> -> vector<16x32xf32>
    %c0_18 = arith.constant 0 : index
    %c0_19 = arith.constant 0 : index
    %43 = vector.load %arg3[%c0_18, %c0_19] : memref<16x3xf32, #tpu.memory_space<vmem>>, vector<16x3xf32>
    %c0_20 = arith.constant 0 : index
    %c0_21 = arith.constant 0 : index
    %44 = vector.load %arg8[%c0_20, %c0_21] : memref<3x32xf32, #tpu.memory_space<vmem>>, vector<3x32xf32>
    %cst_22 = arith.constant dense<0.000000e+00> : vector<16x32xf32>
    %45 = tpu.matmul %43, %44, %cst_22 {dimension_numbers = #tpu.dot_dimension_numbers<[1], [0], [0], [1], [0, 0, 1, 1], [], []>} : vector<16x3xf32>, vector<3x32xf32>, vector<16x32xf32> -> vector<16x32xf32>
    %46 = arith.addf %42, %45 : vector<16x32xf32>
    %47 = vector.broadcast %1 : vector<1x32xf32> to vector<16x32xf32>
    %48 = arith.addf %46, %47 : vector<16x32xf32>
    %cst_23 = arith.constant 0.000000e+00 : f32
    %49 = vector.broadcast %cst_23 : f32 to vector<16x32xf32>
    %50 = arith.maximumf %48, %49 : vector<16x32xf32>
    %c0_24 = arith.constant 0 : index
    %c0_25 = arith.constant 0 : index
    %51 = vector.load %arg9[%c0_24, %c0_25] : memref<32x32xf32, #tpu.memory_space<vmem>>, vector<32x32xf32>
    %cst_26 = arith.constant dense<0.000000e+00> : vector<16x32xf32>
    %52 = tpu.matmul %50, %51, %cst_26 {dimension_numbers = #tpu.dot_dimension_numbers<[1], [0], [0], [1], [0, 0, 1, 1], [], []>} : vector<16x32xf32>, vector<32x32xf32>, vector<16x32xf32> -> vector<16x32xf32>
    %53 = vector.broadcast %2 : vector<1x32xf32> to vector<16x32xf32>
    %54 = arith.addf %52, %53 : vector<16x32xf32>
    %55 = vector.extract_strided_slice %54 {offsets = [0, 0], sizes = [8, 32], strides = [1, 1]} : vector<16x32xf32> to vector<8x32xf32>
    %cst_27 = arith.constant dense<0.000000e+00> : vector<32xf32>
    %56 = vector.multi_reduction <add>, %55, %cst_27 [0] : vector<8x32xf32> to vector<32xf32>
    %57 = vector.shape_cast %56 : vector<32xf32> to vector<1x32xf32>
    %cst_28 = arith.constant 8.000000e+00 : f32
    %58 = vector.broadcast %cst_28 : f32 to vector<1x32xf32>
    %59 = arith.divf %57, %58 : vector<1x32xf32>
    %60 = vector.extract_strided_slice %54 {offsets = [8, 0], sizes = [8, 32], strides = [1, 1]} : vector<16x32xf32> to vector<8x32xf32>
    %cst_29 = arith.constant dense<0.000000e+00> : vector<32xf32>
    %61 = vector.multi_reduction <add>, %60, %cst_29 [0] : vector<8x32xf32> to vector<32xf32>
    %62 = vector.shape_cast %61 : vector<32xf32> to vector<1x32xf32>
    %cst_30 = arith.constant 8.000000e+00 : f32
    %63 = vector.broadcast %cst_30 : f32 to vector<1x32xf32>
    %64 = arith.divf %62, %63 : vector<1x32xf32>
    %65 = tpu.concatenate %59, %64 in 0 : vector<1x32xf32>, vector<1x32xf32> -> vector<2x32xf32>
    %66 = arith.addf %39, %65 : vector<2x32xf32>
    %67 = vector.shape_cast %13 : vector<1x9xf32> to vector<1x9xf32>
    %68 = vector.broadcast %67 : vector<1x9xf32> to vector<16x9xf32>
    %69 = vector.shape_cast %19 : vector<1x9xf32> to vector<1x9xf32>
    %70 = vector.broadcast %69 : vector<1x9xf32> to vector<16x9xf32>
    %71 = tpu.concatenate %68, %70 in 0 : vector<16x9xf32>, vector<16x9xf32> -> vector<32x9xf32>
    %72 = vector.shape_cast %14 : vector<1x9xf32> to vector<1x9xf32>
    %73 = vector.broadcast %72 : vector<1x9xf32> to vector<16x9xf32>
    %74 = vector.shape_cast %20 : vector<1x9xf32> to vector<1x9xf32>
    %75 = vector.broadcast %74 : vector<1x9xf32> to vector<16x9xf32>
    %76 = tpu.concatenate %73, %75 in 0 : vector<16x9xf32>, vector<16x9xf32> -> vector<32x9xf32>
    %c0_31 = arith.constant 0 : index
    %c0_32 = arith.constant 0 : index
    %77 = vector.load %arg4[%c0_31, %c0_32] : memref<32x9xf32, #tpu.memory_space<vmem>>, vector<32x9xf32>
    %78 = arith.mulf %71, %77 : vector<32x9xf32>
    %c0_33 = arith.constant 0 : index
    %c0_34 = arith.constant 0 : index
    %79 = vector.load %arg5[%c0_33, %c0_34] : memref<32x9xf32, #tpu.memory_space<vmem>>, vector<32x9xf32>
    %80 = arith.mulf %76, %79 : vector<32x9xf32>
    %81 = arith.addf %78, %80 : vector<32x9xf32>
    %82 = vector.extract_strided_slice %66 {offsets = [0, 0], sizes = [1, 32], strides = [1, 1]} : vector<2x32xf32> to vector<1x32xf32>
    %83 = vector.shape_cast %82 : vector<1x32xf32> to vector<1x32xf32>
    %84 = vector.broadcast %83 : vector<1x32xf32> to vector<16x32xf32>
    %85 = vector.extract_strided_slice %66 {offsets = [1, 0], sizes = [1, 32], strides = [1, 1]} : vector<2x32xf32> to vector<1x32xf32>
    %86 = vector.shape_cast %85 : vector<1x32xf32> to vector<1x32xf32>
    %87 = vector.broadcast %86 : vector<1x32xf32> to vector<16x32xf32>
    %88 = tpu.concatenate %84, %87 in 0 : vector<16x32xf32>, vector<16x32xf32> -> vector<32x32xf32>
    %c0_35 = arith.constant 0 : index
    %c0_36 = arith.constant 0 : index
    %89 = vector.load %arg12[%c0_35, %c0_36] : memref<9x32xf32, #tpu.memory_space<vmem>>, vector<9x32xf32>
    %cst_37 = arith.constant dense<0.000000e+00> : vector<32x32xf32>
    %90 = tpu.matmul %81, %89, %cst_37 {dimension_numbers = #tpu.dot_dimension_numbers<[1], [0], [0], [1], [0, 0, 1, 1], [], []>} : vector<32x9xf32>, vector<9x32xf32>, vector<32x32xf32> -> vector<32x32xf32>
    %91 = vector.broadcast %4 : vector<1x32xf32> to vector<32x32xf32>
    %92 = arith.addf %90, %91 : vector<32x32xf32>
    %93 = arith.addf %92, %88 : vector<32x32xf32>
    %94 = tpu.iota {dimensions = array<i32: 0>} : vector<32x1xi32>
    %c16_i32 = arith.constant 16 : i32
    %c0_i32 = arith.constant 0 : i32
    %95 = arith.cmpi eq, %c16_i32, %c0_i32 : i32
    %c1_i32 = arith.constant 1 : i32
    %96 = arith.select %95, %c1_i32, %c16_i32 : i32
    %97 = vector.broadcast %96 : i32 to vector<32x1xi32>
    %98 = arith.remsi %94, %97 : vector<32x1xi32>
    %c0_i32_38 = arith.constant 0 : i32
    %99 = vector.broadcast %c0_i32_38 : i32 to vector<32x1xi32>
    %100 = arith.cmpi ne, %98, %99 : vector<32x1xi32>
    %c0_i32_39 = arith.constant 0 : i32
    %101 = vector.broadcast %c0_i32_39 : i32 to vector<32x1xi32>
    %102 = arith.cmpi slt, %98, %101 : vector<32x1xi32>
    %c0_i32_40 = arith.constant 0 : i32
    %103 = arith.cmpi slt, %96, %c0_i32_40 : i32
    %104 = vector.broadcast %103 : i1 to vector<32x1xi1>
    %105 = vector.broadcast %104 : vector<32x1xi1> to vector<32x1xi1>
    %106 = arith.xori %102, %105 : vector<32x1xi1>
    %107 = arith.andi %106, %100 : vector<32x1xi1>
    %108 = vector.broadcast %96 : i32 to vector<32x1xi32>
    %109 = arith.addi %98, %108 : vector<32x1xi32>
    %110 = arith.select %107, %109, %98 : vector<32x1xi1>, vector<32x1xi32>
    %c0_i32_41 = arith.constant 0 : i32
    %111 = vector.broadcast %c0_i32_41 : i32 to vector<32x1xi32>
    %112 = arith.cmpi eq, %110, %111 : vector<32x1xi32>
    %c1_i32_42 = arith.constant 1 : i32
    %113 = tpu.dynamic_rotate %93 by %c1_i32_42 dim 0 : vector<32x32xf32>, i32 -> vector<32x32xf32>
    %cst_43 = arith.constant 0.000000e+00 : f32
    %114 = vector.shape_cast %112 : vector<32x1xi1> to vector<32x1xi1>
    %115 = vector.broadcast %114 : vector<32x1xi1> to vector<32x32xi1>
    %116 = vector.broadcast %cst_43 : f32 to vector<32x32xf32>
    %117 = arith.select %115, %116, %113 : vector<32x32xi1>, vector<32x32xf32>
    %c15_i32 = arith.constant 15 : i32
    %118 = vector.broadcast %c15_i32 : i32 to vector<32x1xi32>
    %119 = arith.cmpi eq, %110, %118 : vector<32x1xi32>
    %c31_i32 = arith.constant 31 : i32
    %120 = tpu.dynamic_rotate %93 by %c31_i32 dim 0 : vector<32x32xf32>, i32 -> vector<32x32xf32>
    %cst_44 = arith.constant 0.000000e+00 : f32
    %121 = vector.shape_cast %119 : vector<32x1xi1> to vector<32x1xi1>
    %122 = vector.broadcast %121 : vector<32x1xi1> to vector<32x32xi1>
    %123 = vector.broadcast %cst_44 : f32 to vector<32x32xf32>
    %124 = arith.select %122, %123, %120 : vector<32x32xi1>, vector<32x32xf32>
    %c0_45 = arith.constant 0 : index
    %c0_46 = arith.constant 0 : index
    %125 = vector.load %arg13[%c0_45, %c0_46] : memref<96x32xf32, #tpu.memory_space<vmem>>, vector<96x32xf32>
    %126 = vector.extract_strided_slice %125 {offsets = [0, 0], sizes = [32, 32], strides = [1, 1]} : vector<96x32xf32> to vector<32x32xf32>
    %cst_47 = arith.constant dense<0.000000e+00> : vector<32x32xf32>
    %127 = tpu.matmul %117, %126, %cst_47 {dimension_numbers = #tpu.dot_dimension_numbers<[1], [0], [0], [1], [0, 0, 1, 1], [], []>} : vector<32x32xf32>, vector<32x32xf32>, vector<32x32xf32> -> vector<32x32xf32>
    %128 = vector.extract_strided_slice %125 {offsets = [32, 0], sizes = [32, 32], strides = [1, 1]} : vector<96x32xf32> to vector<32x32xf32>
    %cst_48 = arith.constant dense<0.000000e+00> : vector<32x32xf32>
    %129 = tpu.matmul %93, %128, %cst_48 {dimension_numbers = #tpu.dot_dimension_numbers<[1], [0], [0], [1], [0, 0, 1, 1], [], []>} : vector<32x32xf32>, vector<32x32xf32>, vector<32x32xf32> -> vector<32x32xf32>
    %130 = arith.addf %127, %129 : vector<32x32xf32>
    %131 = vector.extract_strided_slice %125 {offsets = [64, 0], sizes = [32, 32], strides = [1, 1]} : vector<96x32xf32> to vector<32x32xf32>
    %cst_49 = arith.constant dense<0.000000e+00> : vector<32x32xf32>
    %132 = tpu.matmul %124, %131, %cst_49 {dimension_numbers = #tpu.dot_dimension_numbers<[1], [0], [0], [1], [0, 0, 1, 1], [], []>} : vector<32x32xf32>, vector<32x32xf32>, vector<32x32xf32> -> vector<32x32xf32>
    %133 = arith.addf %130, %132 : vector<32x32xf32>
    %134 = vector.broadcast %5 : vector<1x32xf32> to vector<32x32xf32>
    %135 = arith.addf %133, %134 : vector<32x32xf32>
    %136 = math.absf %135 : vector<32x32xf32>
    %cst_50 = arith.constant 0.000000e+00 : f32
    %137 = vector.broadcast %cst_50 : f32 to vector<32x32xf32>
    %138 = arith.subf %137, %136 : vector<32x32xf32>
    %139 = math.exp %138 : vector<32x32xf32>
    %140 = math.log1p %139 : vector<32x32xf32>
    %cst_51 = arith.constant 0.000000e+00 : f32
    %141 = vector.broadcast %cst_51 : f32 to vector<32x32xf32>
    %142 = arith.maximumf %135, %141 : vector<32x32xf32>
    %143 = arith.addf %140, %142 : vector<32x32xf32>
    %144 = math.tanh %143 : vector<32x32xf32>
    %145 = arith.mulf %135, %144 : vector<32x32xf32>
    %146 = arith.addf %145, %93 : vector<32x32xf32>
    %c0_52 = arith.constant 0 : index
    %c0_53 = arith.constant 0 : index
    %147 = vector.load %arg14[%c0_52, %c0_53] : memref<32x128xf32, #tpu.memory_space<vmem>>, vector<32x128xf32>
    %cst_54 = arith.constant dense<0.000000e+00> : vector<32x128xf32>
    %148 = tpu.matmul %146, %147, %cst_54 {dimension_numbers = #tpu.dot_dimension_numbers<[1], [0], [0], [1], [0, 0, 1, 1], [], []>} : vector<32x32xf32>, vector<32x128xf32>, vector<32x128xf32> -> vector<32x128xf32>
    %149 = vector.broadcast %8 : vector<1x128xf32> to vector<32x128xf32>
    %150 = arith.addf %148, %149 : vector<32x128xf32>
    %c0_55 = arith.constant 0 : index
    %c0_56 = arith.constant 0 : index
    %151 = vector.load %arg17[%c0_55, %c0_56] : memref<32x128xf32, #tpu.memory_space<vmem>>, vector<32x128xf32>
    tpu.vector_store %arg17[%c0_55, %c0_56], %150 {strides = array<i32>} : memref<32x128xf32, #tpu.memory_space<vmem>>, vector<32x128xf32>,
    return
  }
  func.func @transform_0(%arg0: i32, %arg1: memref<2xi32, #tpu.memory_space<smem>>) -> (i32, i32) {
    %c0_i32 = arith.constant 0 : i32
    %c0_i32_0 = arith.constant 0 : i32
    %c0_i32_1 = arith.constant 0 : i32
    return %c0_i32, %c0_i32_0 : i32, i32
  }
  func.func @transform_1(%arg0: i32, %arg1: memref<2xi32, #tpu.memory_space<smem>>) -> (i32, i32) {
    %c0_i32 = arith.constant 0 : i32
    %c0_i32_0 = arith.constant 0 : i32
    %c0_i32_1 = arith.constant 0 : i32
    return %c0_i32, %c0_i32_0 : i32, i32
  }
  func.func @transform_2(%arg0: i32, %arg1: memref<2xi32, #tpu.memory_space<smem>>) -> (i32, i32) {
    %c0_i32 = arith.constant 0 : i32
    %c0_i32_0 = arith.constant 0 : i32
    %c0_i32_1 = arith.constant 0 : i32
    return %c0_i32, %c0_i32_0 : i32, i32
  }
  func.func @transform_3(%arg0: i32, %arg1: memref<2xi32, #tpu.memory_space<smem>>) -> (i32, i32) {
    %c0_i32 = arith.constant 0 : i32
    %c0_i32_0 = arith.constant 0 : i32
    %c0_i32_1 = arith.constant 0 : i32
    return %c0_i32, %c0_i32_0 : i32, i32
  }
  func.func @transform_4(%arg0: i32, %arg1: memref<2xi32, #tpu.memory_space<smem>>) -> (i32, i32) {
    %c0_i32 = arith.constant 0 : i32
    %c0_i32_0 = arith.constant 0 : i32
    %c0_i32_1 = arith.constant 0 : i32
    return %c0_i32, %c0_i32_0 : i32, i32
  }
  func.func @transform_5(%arg0: i32, %arg1: memref<2xi32, #tpu.memory_space<smem>>) -> (i32, i32) {
    %c0_i32 = arith.constant 0 : i32
    %c0_i32_0 = arith.constant 0 : i32
    %c0_i32_1 = arith.constant 0 : i32
    return %c0_i32, %c0_i32_0 : i32, i32
  }
  func.func @transform_6(%arg0: i32, %arg1: memref<2xi32, #tpu.memory_space<smem>>) -> (i32, i32) {
    %c0_i32 = arith.constant 0 : i32
    %c0_i32_0 = arith.constant 0 : i32
    %c0_i32_1 = arith.constant 0 : i32
    return %c0_i32, %c0_i32_0 : i32, i32
  }
  func.func @transform_7(%arg0: i32, %arg1: memref<2xi32, #tpu.memory_space<smem>>) -> (i32, i32) {
    %c0_i32 = arith.constant 0 : i32
    %c0_i32_0 = arith.constant 0 : i32
    %c0_i32_1 = arith.constant 0 : i32
    return %c0_i32, %c0_i32_0 : i32, i32
  }
  func.func @transform_8(%arg0: i32, %arg1: memref<2xi32, #tpu.memory_space<smem>>) -> (i32, i32) {
    %c0_i32 = arith.constant 0 : i32
    %c0_i32_0 = arith.constant 0 : i32
    %c0_i32_1 = arith.constant 0 : i32
    return %c0_i32, %c0_i32_0 : i32, i32
  }
  func.func @transform_9(%arg0: i32, %arg1: memref<2xi32, #tpu.memory_space<smem>>) -> (i32, i32) {
    %c0_i32 = arith.constant 0 : i32
    %c0_i32_0 = arith.constant 0 : i32
    %c0_i32_1 = arith.constant 0 : i32
    return %c0_i32, %c0_i32_0 : i32, i32
  }
  func.func @transform_10(%arg0: i32, %arg1: memref<2xi32, #tpu.memory_space<smem>>) -> (i32, i32) {
    %c0_i32 = arith.constant 0 : i32
    %c0_i32_0 = arith.constant 0 : i32
    %c0_i32_1 = arith.constant 0 : i32
    return %c0_i32, %c0_i32_0 : i32, i32
  }
  func.func @transform_11(%arg0: i32, %arg1: memref<2xi32, #tpu.memory_space<smem>>) -> (i32, i32) {
    %c0_i32 = arith.constant 0 : i32
    %c0_i32_0 = arith.constant 0 : i32
    %c0_i32_1 = arith.constant 0 : i32
    return %c0_i32, %c0_i32_0 : i32, i32
  }
  func.func @transform_12(%arg0: i32, %arg1: memref<2xi32, #tpu.memory_space<smem>>) -> (i32, i32) {
    %c0_i32 = arith.constant 0 : i32
    %c0_i32_0 = arith.constant 0 : i32
    %c0_i32_1 = arith.constant 0 : i32
    return %c0_i32, %c0_i32_0 : i32, i32
  }
  func.func @transform_13(%arg0: i32, %arg1: memref<2xi32, #tpu.memory_space<smem>>) -> (i32, i32) {
    %c0_i32 = arith.constant 0 : i32
    %c0_i32_0 = arith.constant 0 : i32
    %c0_i32_1 = arith.constant 0 : i32
    return %c0_i32, %c0_i32_0 : i32, i32
  }
  func.func @transform_14(%arg0: i32, %arg1: memref<2xi32, #tpu.memory_space<smem>>) -> (i32, i32) {
    %c0_i32 = arith.constant 0 : i32
    %c0_i32_0 = arith.constant 0 : i32
    %c0_i32_1 = arith.constant 0 : i32
    return %c0_i32, %c0_i32_0 : i32, i32
  }
  func.func @transform_15(%arg0: i32, %arg1: memref<2xi32, #tpu.memory_space<smem>>) -> (i32, i32) {
    %c0_i32 = arith.constant 0 : i32
    %c0_i32_0 = arith.constant 0 : i32
    %c0_i32_1 = arith.constant 0 : i32
    return %c0_i32, %c0_i32_0 : i32, i32
  }
}

</mosaic_0001>

<llo_original>
// kernel: _forward_impl.1
$region0: #{_forward_impl.1}
  #allocation0 [shape = 'u32[]', space=smem, size = 0x4, offset = 0x4, fixed_abs, tag = 'smem constant byte address 0x4 - core index']
  #allocation1 [shape = 'u32[144,128]{1,0:T(1,128)}', space=vmem, size = 0x12000, scoped, tag = 'internal scratch']
  #allocation2 [shape = 's32[1]{0}', space=sflag, size = 0x4, scoped, tag = 'scoped memory for _forward_impl.1']
  #allocation3 [shape = 'u8[512]{0}', space=smem, size = 0x200, scoped, tag = 'prefetched SMEM operand 0']
  %s0 = inlined_call_operand.vmem [shape: s32[2], index: 0, kind: input, shape index: {}]
  %s1 = inlined_call_operand.hbm [shape: f32[16,64], index: 1, kind: input, shape index: {}]
  %s2 = inlined_call_operand.vmem [shape: f32[16,3], index: 2, kind: input, shape index: {}]
  %s3 = inlined_call_operand.vmem [shape: f32[32,9], index: 3, kind: input, shape index: {}]
  %s4 = inlined_call_operand.vmem [shape: f32[32,9], index: 4, kind: input, shape index: {}]
  %s5 = inlined_call_operand.vmem [shape: f32[100,50], index: 5, kind: input, shape index: {}]
  %s6 = inlined_call_operand.hbm [shape: f32[64,32], index: 6, kind: input, shape index: {}]
  %s7 = inlined_call_operand.vmem [shape: f32[3,32], index: 7, kind: input, shape index: {}]
  %s8 = inlined_call_operand.hbm [shape: f32[32,32], index: 8, kind: input, shape index: {}]
  %s9 = inlined_call_operand.hbm [shape: f32[32,128], index: 9, kind: input, shape index: {}]
  %s10 = inlined_call_operand.vmem [shape: f32[128,32], index: 10, kind: input, shape index: {}]
  %s11 = inlined_call_operand.vmem [shape: f32[9,32], index: 11, kind: input, shape index: {}]
  %s12 = inlined_call_operand.vmem [shape: f32[96,32], index: 12, kind: input, shape index: {}]
  %s13 = inlined_call_operand.hbm [shape: f32[32,128], index: 13, kind: input, shape index: {}]
  %s14 = inlined_call_operand.vmem [shape: f32[8,32], index: 14, kind: input, shape index: {}]
  %s15 = inlined_call_operand.vmem [shape: f32[2,128], index: 15, kind: input, shape index: {}]
  %s16 = inlined_call_operand.vmem [shape: f32[32,128], index: 16, kind: output, shape index: {}]
  %s17 = sld [smem:[#allocation0]]
  $region90: #{_forward_impl.1} parent=0
    _
  %s19 = ssub.s32 1, %s17
  %s20 = scalar_select 0, %s19, %s17
  %s21 = sshll.u32 %s0, 4
  %s22 = int_to_ptr.vmem [resolvable:$true] %s21
  %24 = dma.vmem_to_smem %s22, 16, [#allocation3], [#allocation2]
  %25 = dma.done [#allocation2], 16
  %26 = sfence
  $region1: #{_forward_impl.1} parent=0
    #allocation4 [shape = 'u8[8192]{0}', space=vmem, size = 0x2000, scoped, tag = 'input window, operand 1, single buffered']
    #allocation5 [shape = 's32[1]{0}', space=sflag, size = 0x4, scoped, tag = 'scoped memory for _forward_impl.1']
    #allocation6 [shape = 'u8[32768]{0}', space=vmem, size = 0x8000, scoped, tag = 'input window, operand 6, single buffered']
    #allocation7 [shape = 's32[1]{0}', space=sflag, size = 0x4, scoped, tag = 'scoped memory for _forward_impl.1']
    #allocation8 [shape = 'u8[16384]{0}', space=vmem, size = 0x4000, scoped, tag = 'input window, operand 8, single buffered']
    #allocation9 [shape = 'u8[16384]{0}', space=vmem, size = 0x4000, scoped, tag = 'input window, operand 9, single buffered']
    #allocation10 [shape = 's32[1]{0}', space=sflag, size = 0x4, scoped, tag = 'scoped memory for _forward_impl.1']
    #allocation11 [shape = 'u8[16384]{0}', space=vmem, size = 0x4000, scoped, tag = 'input window, operand 13, single buffered']
    %27 = vsyncpa [#allocation5], 0
    %28 = vsyncpa [#allocation7], 0
    %29 = vsyncpa [#allocation10], 0
    // Predicated region
    $region2: #{_forward_impl.1} parent=1 // pred_check
      _
    $region3: #{_forward_impl.1} parent=1 // pred_check_branch
      %31 = sbr.rel (0) target = $region5
    $region4: #{_forward_impl.1} parent=1 // pred_region
      %s33 = ssub.s32 256, 256
      %34 = vsyncadd [#allocation5], %s33
      %s35 = sshll.u32 [#allocation4], 4
      %s36 = int_to_ptr.vmem [resolvable:$true] %s35
      %41 = dma.hbm_to_vmem [thread:$0]  %s1, 256, %s36, [#allocation5], 128, 128, 8
    $region5: #{_forward_impl.1} parent=1 // pred_fallthru
      _
    // Predicated region
    $region6: #{_forward_impl.1} parent=1 // pred_check
      _
    $region7: #{_forward_impl.1} parent=1 // pred_check_branch
      %43 = sbr.rel (0) target = $region9
    $region8: #{_forward_impl.1} parent=1 // pred_region
      _
    $region9: #{_forward_impl.1} parent=1 // pred_fallthru
      _
    // Predicated region
    $region10: #{_forward_impl.1} parent=1 // pred_check
      _
    $region11: #{_forward_impl.1} parent=1 // pred_check_branch
      %45 = sbr.rel (0) target = $region13
    $region12: #{_forward_impl.1} parent=1 // pred_region
      _
    $region13: #{_forward_impl.1} parent=1 // pred_fallthru
      _
    // Predicated region
    $region14: #{_forward_impl.1} parent=1 // pred_check
      _
    $region15: #{_forward_impl.1} parent=1 // pred_check_branch
      %47 = sbr.rel (0) target = $region17
    $region16: #{_forward_impl.1} parent=1 // pred_region
      _
    $region17: #{_forward_impl.1} parent=1 // pred_fallthru
      _
    // Predicated region
    $region18: #{_forward_impl.1} parent=1 // pred_check
      _
    $region19: #{_forward_impl.1} parent=1 // pred_check_branch
      %49 = sbr.rel (0) target = $region21
    $region20: #{_forward_impl.1} parent=1 // pred_region
      _
    $region21: #{_forward_impl.1} parent=1 // pred_fallthru
      _
    // Predicated region
    $region22: #{_forward_impl.1} parent=1 // pred_check
      _
    $region23: #{_forward_impl.1} parent=1 // pred_check_branch
      %51 = sbr.rel (0) target = $region25
    $region24: #{_forward_impl.1} parent=1 // pred_region
      %s53 = ssub.s32 1024, 1024
      %54 = vsyncadd [#allocation7], %s53
      %s55 = sshll.u32 [#allocation6], 4
      %s56 = int_to_ptr.vmem [resolvable:$true] %s55
      %61 = dma.hbm_to_vmem [thread:$0]  %s6, 1024, %s56, [#allocation7], 128, 128, 8
    $region25: #{_forward_impl.1} parent=1 // pred_fallthru
      _
    // Predicated region
    $region26: #{_forward_impl.1} parent=1 // pred_check
      _
    $region27: #{_forward_impl.1} parent=1 // pred_check_branch
      %63 = sbr.rel (0) target = $region29
    $region28: #{_forward_impl.1} parent=1 // pred_region
      _
    $region29: #{_forward_impl.1} parent=1 // pred_fallthru
      _
    // Predicated region
    $region30: #{_forward_impl.1} parent=1 // pred_check
      _
    $region31: #{_forward_impl.1} parent=1 // pred_check_branch
      %65 = sbr.rel (0) target = $region33
    $region32: #{_forward_impl.1} parent=1 // pred_region
      %s67 = ssub.s32 512, 512
      %68 = vsyncadd [#allocation7], %s67
      %s69 = sshll.u32 [#allocation8], 4
      %s70 = int_to_ptr.vmem [resolvable:$true] %s69
      %75 = dma.hbm_to_vmem [thread:$0]  %s8, 512, %s70, [#allocation7], 128, 128, 8
    $region33: #{_forward_impl.1} parent=1 // pred_fallthru
      _
    // Predicated region
    $region34: #{_forward_impl.1} parent=1 // pred_check
      _
    $region35: #{_forward_impl.1} parent=1 // pred_check_branch
      %77 = sbr.rel (0) target = $region37
    $region36: #{_forward_impl.1} parent=1 // pred_region
      %s79 = ssub.s32 512, 512
      %80 = vsyncadd [#allocation10], %s79
      %s81 = sshll.u32 [#allocation9], 4
      %s82 = int_to_ptr.vmem [resolvable:$true] %s81
      %87 = dma.hbm_to_vmem [thread:$0]  %s9, 512, %s82, [#allocation10], 128, 128, 8
    $region37: #{_forward_impl.1} parent=1 // pred_fallthru
      _
    // Predicated region
    $region38: #{_forward_impl.1} parent=1 // pred_check
      _
    $region39: #{_forward_impl.1} parent=1 // pred_check_branch
      %89 = sbr.rel (0) target = $region41
    $region40: #{_forward_impl.1} parent=1 // pred_region
      _
    $region41: #{_forward_impl.1} parent=1 // pred_fallthru
      _
    // Predicated region
    $region42: #{_forward_impl.1} parent=1 // pred_check
      _
    $region43: #{_forward_impl.1} parent=1 // pred_check_branch
      %91 = sbr.rel (0) target = $region45
    $region44: #{_forward_impl.1} parent=1 // pred_region
      _
    $region45: #{_forward_impl.1} parent=1 // pred_fallthru
      _
    // Predicated region
    $region46: #{_forward_impl.1} parent=1 // pred_check
      _
    $region47: #{_forward_impl.1} parent=1 // pred_check_branch
      %93 = sbr.rel (0) target = $region49
    $region48: #{_forward_impl.1} parent=1 // pred_region
      _
    $region49: #{_forward_impl.1} parent=1 // pred_fallthru
      _
    // Predicated region
    $region50: #{_forward_impl.1} parent=1 // pred_check
      _
    $region51: #{_forward_impl.1} parent=1 // pred_check_branch
      %95 = sbr.rel (0) target = $region53
    $region52: #{_forward_impl.1} parent=1 // pred_region
      %s97 = ssub.s32 512, 512
      %98 = vsyncadd [#allocation10], %s97
      %s99 = sshll.u32 [#allocation11], 4
      %s100 = int_to_ptr.vmem [resolvable:$true] %s99
      %105 = dma.hbm_to_vmem [thread:$0]  %s13, 512, %s100, [#allocation10], 128, 128, 8
    $region53: #{_forward_impl.1} parent=1 // pred_fallthru
      _
    // Predicated region
    $region54: #{_forward_impl.1} parent=1 // pred_check
      _
    $region55: #{_forward_impl.1} parent=1 // pred_check_branch
      %107 = sbr.rel (0) target = $region57
    $region56: #{_forward_impl.1} parent=1 // pred_region
      _
    $region57: #{_forward_impl.1} parent=1 // pred_fallthru
      _
    // Predicated region
    $region58: #{_forward_impl.1} parent=1 // pred_check
      _
    $region59: #{_forward_impl.1} parent=1 // pred_check_branch
      %109 = sbr.rel (0) target = $region61
    $region60: #{_forward_impl.1} parent=1 // pred_region
      _
    $region61: #{_forward_impl.1} parent=1 // pred_fallthru
      _
    // Predicated region
    $region62: #{_forward_impl.1} parent=1 // pred_check
      _
    $region63: #{_forward_impl.1} parent=1 // pred_check_branch
      %111 = sbr.rel (0) target = $region65
    $region64: #{_forward_impl.1} parent=1 // pred_region
      %112 = dma.done [#allocation5], 256
    $region65: #{_forward_impl.1} parent=1 // pred_fallthru
      _
    // Predicated region
    $region66: #{_forward_impl.1} parent=1 // pred_check
      _
    $region67: #{_forward_impl.1} parent=1 // pred_check_branch
      %114 = sbr.rel (0) target = $region69
    $region68: #{_forward_impl.1} parent=1 // pred_region
      %115 = dma.done [#allocation7], 1024
    $region69: #{_forward_impl.1} parent=1 // pred_fallthru
      _
    // Predicated region
    $region70: #{_forward_impl.1} parent=1 // pred_check
      _
    $region71: #{_forward_impl.1} parent=1 // pred_check_branch
      %117 = sbr.rel (0) target = $region73
    $region72: #{_forward_impl.1} parent=1 // pred_region
      %118 = dma.done [#allocation7], 512
    $region73: #{_forward_impl.1} parent=1 // pred_fallthru
      _
    // Predicated region
    $region74: #{_forward_impl.1} parent=1 // pred_check
      _
    $region75: #{_forward_impl.1} parent=1 // pred_check_branch
      %120 = sbr.rel (0) target = $region77
    $region76: #{_forward_impl.1} parent=1 // pred_region
      %121 = dma.done [#allocation10], 512
    $region77: #{_forward_impl.1} parent=1 // pred_fallthru
      _
    // Predicated region
    $region78: #{_forward_impl.1} parent=1 // pred_check
      _
    $region79: #{_forward_impl.1} parent=1 // pred_check_branch
      %123 = sbr.rel (0) target = $region81
    $region80: #{_forward_impl.1} parent=1 // pred_region
      %124 = dma.done [#allocation10], 512
    $region81: #{_forward_impl.1} parent=1 // pred_fallthru
      _
    %v125 = vld [vmem:[%s14] sm:$0xff]
    %v126 = vld [vmem:[%s15] sm:$0x3]
    %s127 = sld [smem:[#allocation3]]
    %s128 = scalar_lea.vmem %s5, %s127
    %v129 = vld [vmem:[%s128] sm:$0x1]
    %s130 = sld [smem:[#allocation3 + $0x1]]
    %s131 = scalar_lea.vmem %s5, %s130
    %v132 = vld [vmem:[%s131] sm:$0x1]
    %v134 = vrot.slane %v132, 7
    %vm136 = vcmask 1040384
    %v137 = vsel %vm136, %v129, %v134
    %v138 = vld [vmem:[#allocation9] sm:$0xff]
    %v139 = vld [vmem:[#allocation9 + $0x8] sm:$0xff]
    %v140 = vld [vmem:[#allocation9 + $0x10] sm:$0xff]
    %v141 = vld [vmem:[#allocation9 + $0x18] sm:$0xff]
    %v142 = vlaneseq
    %v143 = vshrl.u32 %v142, 7
    %v144 = vsub.s32 0, %v143
    %v145 = vrot.slane %v126, %v144
    %vm146 = vcmask 261120
    %v148 = vsel %vm146, %v137, 0
    %150 = vmatprep.subr.mxu0 0.0
    %151 = vmatpush1.msra.mxu0 0.0
    %152 = vmatprep.subr.mxu0 0.0
    %153 = vmatpush1.msra.mxu0 0.0
    %154 = vmatprep.subr.mxu0 0.0
    %155 = vmatpush1.msra.mxu0 0.0
    %156 = vmatprep.subr.mxu0 0.0
    %157 = vmatpush1.msra.mxu0 0.0
    %158 = vmatprep.subr.mxu0 0.0
    %159 = vmatpush1.msra.mxu0 0.0
    %160 = vmatprep.subr.mxu0 0.0
    %161 = vmatpush1.msra.mxu0 0.0
    %162 = vmatprep.subr.mxu0 0.0
    %163 = vmatpush1.msra.mxu0 0.0
    %164 = vmatprep.subr.mxu0 0.0
    %165 = vmatpush1.msra.mxu0 0.0
    %166 = vmatprep.subr.mxu0 0.0
    %167 = vmatpush1.msra.mxu0 0.0
    %168 = vmatprep.subr.mxu0 0.0
    %169 = vmatpush1.msra.mxu0 0.0
    %170 = vmatprep.subr.mxu0 0.0
    %171 = vmatpush1.msra.mxu0 0.0
    %172 = vmatprep.subr.mxu0 0.0
    %173 = vmatpush1.msra.mxu0 0.0
    %174 = vmatprep.subr.mxu0 0.0
    %175 = vmatpush1.msra.mxu0 %v141
    %176 = vmatprep.subr.mxu0 0.0
    %177 = vmatpush1.msra.mxu0 %v140
    %178 = vmatprep.subr.mxu0 0.0
    %179 = vmatpush1.msra.mxu0 %v139
    %180 = vmatprep.subr.mxu0 0.0
    %181 = vmatpush1.msra.mxu0 %v138
    %182 = vmatprep.subr.mxu0 0.0
    %183 = vmatpush2.msra.mxu0 0.0
    %184 = vmatprep.subr.mxu0 0.0
    %185 = vmatpush2.msra.mxu0 0.0
    %186 = vmatprep.subr.mxu0 0.0
    %187 = vmatpush2.msra.mxu0 0.0
    %188 = vmatprep.subr.mxu0 0.0
    %189 = vmatpush2.msra.mxu0 0.0
    %190 = vmatprep.subr.mxu0 0.0
    %191 = vmatpush2.msra.mxu0 0.0
    %192 = vmatprep.subr.mxu0 0.0
    %193 = vmatpush2.msra.mxu0 0.0
    %194 = vmatprep.subr.mxu0 0.0
    %195 = vmatpush2.msra.mxu0 0.0
    %196 = vmatprep.subr.mxu0 0.0
    %197 = vmatpush2.msra.mxu0 0.0
    %198 = vmatprep.subr.mxu0 0.0
    %199 = vmatpush2.msra.mxu0 0.0
    %200 = vmatprep.subr.mxu0 0.0
    %201 = vmatpush2.msra.mxu0 0.0
    %202 = vmatprep.subr.mxu0 0.0
    %203 = vmatpush2.msra.mxu0 0.0
    %204 = vmatprep.subr.mxu0 0.0
    %205 = vmatpush2.msra.mxu0 0.0
    %206 = vmatprep.subr.mxu0 0.0
    %207 = vmatpush2.msra.mxu0 0.0
    %208 = vmatprep.subr.mxu0 0.0
    %209 = vmatpush2.msra.mxu0 0.0
    %210 = vmatprep.subr.mxu0 0.0
    %211 = vmatpush2.msra.mxu0 0.0
    %212 = vmatprep.subr.mxu0 0.0
    %213 = vmatpush2.msra.mxu0 0.0
    %214 = vmatprep.mubr.f32.mxu0 0.0
    %215 = vmatmul.mubr.f32.gmra.mxu0 %v148
    %v216 = vpop.f32.mrf.mxu0
    %v217 = vadd.f32 %v145, %v216
    %v218 = vpop.f32.mrf.mxu0
    %219 = vdwg.mxu0
    %v220 = vand.u32 2147483647, %v217
    %v221 = vsub.f32 0.0, %v220
    %v222 = vmul.f32 %v221, 1.442695
    %v223 = vpow.pop %v222
    %v224 = vadd.f32 %v223, 1.0
    %v225 = vlog2.pop %v224
    %v226 = vmul.f32 %v225, 0.6931472
    %v227 = vmul.f32 -0.5, %v223
    %v228 = vadd.f32 %v227, 1.0
    %v229 = vmul.f32 %v228, %v223
    %v230 = vand.u32 2147483647, %v223
    %vm231 = vcmp.lt.f32.partialorder %v230, 0.0004427343
    %v232 = vsel %vm231, %v229, %v226
    %v233 = vmax.f32 %v217, 0.0
    %v234 = vadd.f32 %v232, %v233
    %v235 = vtanh.pop %v234
    %v236 = vmul.f32 %v217, %v235
    %v237 = vld [vmem:[%s10] sm:$0xff]
    %v238 = vld [vmem:[%s10 + $0x8] sm:$0xff]
    %v239 = vld [vmem:[%s10 + $0x10] sm:$0xff]
    %v240 = vld [vmem:[%s10 + $0x18] sm:$0xff]
    %v241 = vld [vmem:[%s10 + $0x20] sm:$0xff]
    %v242 = vld [vmem:[%s10 + $0x28] sm:$0xff]
    %v243 = vld [vmem:[%s10 + $0x30] sm:$0xff]
    %v244 = vld [vmem:[%s10 + $0x38] sm:$0xff]
    %v245 = vld [vmem:[%s10 + $0x40] sm:$0xff]
    %v246 = vld [vmem:[%s10 + $0x48] sm:$0xff]
    %v247 = vld [vmem:[%s10 + $0x50] sm:$0xff]
    %v248 = vld [vmem:[%s10 + $0x58] sm:$0xff]
    %v249 = vld [vmem:[%s10 + $0x60] sm:$0xff]
    %v250 = vld [vmem:[%s10 + $0x68] sm:$0xff]
    %v251 = vld [vmem:[%s10 + $0x70] sm:$0xff]
    %v252 = vld [vmem:[%s10 + $0x78] sm:$0xff]
    %v253 = vlaneseq
    %v254 = vshrl.u32 %v253, 7
    %v255 = vsub.s32 2, %v254
    %v256 = vrot.slane %v125, %v255
    %257 = vmatprep.subr.mxu0 0.0
    %258 = vmatpush1.msra.mxu0 %v252
    %259 = vmatprep.subr.mxu0 0.0
    %260 = vmatpush1.msra.mxu0 %v251
    %261 = vmatprep.subr.mxu0 0.0
    %262 = vmatpush1.msra.mxu0 %v250
    %263 = vmatprep.subr.mxu0 0.0
    %264 = vmatpush1.msra.mxu0 %v249
    %265 = vmatprep.subr.mxu0 0.0
    %266 = vmatpush1.msra.mxu0 %v248
    %267 = vmatprep.subr.mxu0 0.0
    %268 = vmatpush1.msra.mxu0 %v247
    %269 = vmatprep.subr.mxu0 0.0
    %270 = vmatpush1.msra.mxu0 %v246
    %271 = vmatprep.subr.mxu0 0.0
    %272 = vmatpush1.msra.mxu0 %v245
    %273 = vmatprep.subr.mxu0 0.0
    %274 = vmatpush1.msra.mxu0 %v244
    %275 = vmatprep.subr.mxu0 0.0
    %276 = vmatpush1.msra.mxu0 %v243
    %277 = vmatprep.subr.mxu0 0.0
    %278 = vmatpush1.msra.mxu0 %v242
    %279 = vmatprep.subr.mxu0 0.0
    %280 = vmatpush1.msra.mxu0 %v241
    %281 = vmatprep.subr.mxu0 0.0
    %282 = vmatpush1.msra.mxu0 %v240
    %283 = vmatprep.subr.mxu0 0.0
    %284 = vmatpush1.msra.mxu0 %v239
    %285 = vmatprep.subr.mxu0 0.0
    %286 = vmatpush1.msra.mxu0 %v238
    %287 = vmatprep.subr.mxu0 0.0
    %288 = vmatpush1.msra.mxu0 %v237
    %289 = vmatprep.subr.mxu0 0.0
    %290 = vmatpush2.msra.mxu0 0.0
    %291 = vmatprep.subr.mxu0 0.0
    %292 = vmatpush2.msra.mxu0 0.0
    %293 = vmatprep.subr.mxu0 0.0
    %294 = vmatpush2.msra.mxu0 0.0
    %295 = vmatprep.subr.mxu0 0.0
    %296 = vmatpush2.msra.mxu0 0.0
    %297 = vmatprep.subr.mxu0 0.0
    %298 = vmatpush2.msra.mxu0 0.0
    %299 = vmatprep.subr.mxu0 0.0
    %300 = vmatpush2.msra.mxu0 0.0
    %301 = vmatprep.subr.mxu0 0.0
    %302 = vmatpush2.msra.mxu0 0.0
    %303 = vmatprep.subr.mxu0 0.0
    %304 = vmatpush2.msra.mxu0 0.0
    %305 = vmatprep.subr.mxu0 0.0
    %306 = vmatpush2.msra.mxu0 0.0
    %307 = vmatprep.subr.mxu0 0.0
    %308 = vmatpush2.msra.mxu0 0.0
    %309 = vmatprep.subr.mxu0 0.0
    %310 = vmatpush2.msra.mxu0 0.0
    %311 = vmatprep.subr.mxu0 0.0
    %312 = vmatpush2.msra.mxu0 0.0
    %313 = vmatprep.subr.mxu0 0.0
    %314 = vmatpush2.msra.mxu0 0.0
    %315 = vmatprep.subr.mxu0 0.0
    %316 = vmatpush2.msra.mxu0 0.0
    %317 = vmatprep.subr.mxu0 0.0
    %318 = vmatpush2.msra.mxu0 0.0
    %319 = vmatprep.subr.mxu0 0.0
    %320 = vmatpush2.msra.mxu0 0.0
    %321 = vmatprep.mubr.f32.mxu0 0.0
    %322 = vmatmul.mubr.f32.gmra.mxu0 %v236
    %v323 = vpop.f32.mrf.mxu0
    %v324 = vadd.f32 %v256, %v323
    %v325 = vpop.f32.mrf.mxu0
    %326 = vdwg.mxu0
    %v327 = vld [vmem:[#allocation4] sm:$0xff]
    %v328 = vld [vmem:[#allocation4 + $0x8] sm:$0xff]
    %v329 = vld [vmem:[#allocation6] sm:$0xff]
    %v330 = vld [vmem:[#allocation6 + $0x8] sm:$0xff]
    %v331 = vld [vmem:[#allocation6 + $0x10] sm:$0xff]
    %v332 = vld [vmem:[#allocation6 + $0x18] sm:$0xff]
    %v333 = vld [vmem:[#allocation6 + $0x20] sm:$0xff]
    %v334 = vld [vmem:[#allocation6 + $0x28] sm:$0xff]
    %v335 = vld [vmem:[#allocation6 + $0x30] sm:$0xff]
    %v336 = vld [vmem:[#allocation6 + $0x38] sm:$0xff]
    %v337 = vld [vmem:[%s2] sm:$0xff]
    %v338 = vld [vmem:[%s2 + $0x8] sm:$0xff]
    %v339 = vld [vmem:[%s7] sm:$0x7]
    %vm340 = vcmask 23552
    %v342 = vsel %vm340, %v337, 0
    %v345 = vsel %vm340, %v338, 0
    %vm347 = vcmask 1042432
    %v349 = vsel %vm347, %v339, 0
    %351 = vmatprep.subr.mxu0 0.0
    %352 = vmatpush1.msra.mxu0 0.0
    %353 = vmatprep.subr.mxu0 0.0
    %354 = vmatpush1.msra.mxu0 0.0
    %355 = vmatprep.subr.mxu0 0.0
    %356 = vmatpush1.msra.mxu0 0.0
    %357 = vmatprep.subr.mxu0 0.0
    %358 = vmatpush1.msra.mxu0 0.0
    %359 = vmatprep.subr.mxu0 0.0
    %360 = vmatpush1.msra.mxu0 0.0
    %361 = vmatprep.subr.mxu0 0.0
    %362 = vmatpush1.msra.mxu0 0.0
    %363 = vmatprep.subr.mxu0 0.0
    %364 = vmatpush1.msra.mxu0 0.0
    %365 = vmatprep.subr.mxu0 0.0
    %366 = vmatpush1.msra.mxu0 0.0
    %367 = vmatprep.subr.mxu0 0.0
    %368 = vmatpush1.msra.mxu0 0.0
    %369 = vmatprep.subr.mxu0 0.0
    %370 = vmatpush1.msra.mxu0 0.0
    %371 = vmatprep.subr.mxu0 0.0
    %372 = vmatpush1.msra.mxu0 0.0
    %373 = vmatprep.subr.mxu0 0.0
    %374 = vmatpush1.msra.mxu0 0.0
    %375 = vmatprep.subr.mxu0 0.0
    %376 = vmatpush1.msra.mxu0 0.0
    %377 = vmatprep.subr.mxu0 0.0
    %378 = vmatpush1.msra.mxu0 0.0
    %379 = vmatprep.subr.mxu0 0.0
    %380 = vmatpush1.msra.mxu0 0.0
    %381 = vmatprep.subr.mxu0 0.0
    %382 = vmatpush1.msra.mxu0 %v349
    %383 = vmatprep.subr.mxu0 0.0
    %384 = vmatpush2.msra.mxu0 0.0
    %385 = vmatprep.subr.mxu0 0.0
    %386 = vmatpush2.msra.mxu0 0.0
    %387 = vmatprep.subr.mxu0 0.0
    %388 = vmatpush2.msra.mxu0 0.0
    %389 = vmatprep.subr.mxu0 0.0
    %390 = vmatpush2.msra.mxu0 0.0
    %391 = vmatprep.subr.mxu0 0.0
    %392 = vmatpush2.msra.mxu0 0.0
    %393 = vmatprep.subr.mxu0 0.0
    %394 = vmatpush2.msra.mxu0 0.0
    %395 = vmatprep.subr.mxu0 0.0
    %396 = vmatpush2.msra.mxu0 0.0
    %397 = vmatprep.subr.mxu0 0.0
    %398 = vmatpush2.msra.mxu0 0.0
    %399 = vmatprep.subr.mxu0 0.0
    %400 = vmatpush2.msra.mxu0 0.0
    %401 = vmatprep.subr.mxu0 0.0
    %402 = vmatpush2.msra.mxu0 0.0
    %403 = vmatprep.subr.mxu0 0.0
    %404 = vmatpush2.msra.mxu0 0.0
    %405 = vmatprep.subr.mxu0 0.0
    %406 = vmatpush2.msra.mxu0 0.0
    %407 = vmatprep.subr.mxu0 0.0
    %408 = vmatpush2.msra.mxu0 0.0
    %409 = vmatprep.subr.mxu0 0.0
    %410 = vmatpush2.msra.mxu0 0.0
    %411 = vmatprep.subr.mxu0 0.0
    %412 = vmatpush2.msra.mxu0 0.0
    %413 = vmatprep.subr.mxu0 0.0
    %414 = vmatpush2.msra.mxu0 0.0
    %415 = vmatprep.mubr.f32.mxu0 0.0
    %416 = vmatmul.mubr.f32.gmra.mxu0 %v342
    %v417 = vpop.f32.mrf.mxu0
    %v418 = vadd.f32 0.0, %v417
    %v419 = vpop.f32.mrf.mxu0
    %420 = vmatprep.mubr.f32.mxu0 0.0
    %421 = vmatmul.mubr.f32.gmra.mxu0 %v345
    %v422 = vpop.f32.mrf.mxu0
    %v423 = vadd.f32 0.0, %v422
    %v424 = vpop.f32.mrf.mxu0
    %425 = vdwg.mxu0
    %vm426 = vcmask 523264
    %v428 = vsel %vm426, %v327, 0
    %v431 = vsel %vm426, %v328, 0
    %433 = vmatprep.subr.mxu0 0.0
    %434 = vmatpush1.msra.mxu0 0.0
    %435 = vmatprep.subr.mxu0 0.0
    %436 = vmatpush1.msra.mxu0 0.0
    %437 = vmatprep.subr.mxu0 0.0
    %438 = vmatpush1.msra.mxu0 0.0
    %439 = vmatprep.subr.mxu0 0.0
    %440 = vmatpush1.msra.mxu0 0.0
    %441 = vmatprep.subr.mxu0 0.0
    %442 = vmatpush1.msra.mxu0 0.0
    %443 = vmatprep.subr.mxu0 0.0
    %444 = vmatpush1.msra.mxu0 0.0
    %445 = vmatprep.subr.mxu0 0.0
    %446 = vmatpush1.msra.mxu0 0.0
    %447 = vmatprep.subr.mxu0 0.0
    %448 = vmatpush1.msra.mxu0 0.0
    %449 = vmatprep.subr.mxu0 0.0
    %450 = vmatpush1.msra.mxu0 %v336
    %451 = vmatprep.subr.mxu0 0.0
    %452 = vmatpush1.msra.mxu0 %v335
    %453 = vmatprep.subr.mxu0 0.0
    %454 = vmatpush1.msra.mxu0 %v334
    %455 = vmatprep.subr.mxu0 0.0
    %456 = vmatpush1.msra.mxu0 %v333
    %457 = vmatprep.subr.mxu0 0.0
    %458 = vmatpush1.msra.mxu0 %v332
    %459 = vmatprep.subr.mxu0 0.0
    %460 = vmatpush1.msra.mxu0 %v331
    %461 = vmatprep.subr.mxu0 0.0
    %462 = vmatpush1.msra.mxu0 %v330
    %463 = vmatprep.subr.mxu0 0.0
    %464 = vmatpush1.msra.mxu0 %v329
    %465 = vmatprep.subr.mxu0 0.0
    %466 = vmatpush2.msra.mxu0 0.0
    %467 = vmatprep.subr.mxu0 0.0
    %468 = vmatpush2.msra.mxu0 0.0
    %469 = vmatprep.subr.mxu0 0.0
    %470 = vmatpush2.msra.mxu0 0.0
    %471 = vmatprep.subr.mxu0 0.0
    %472 = vmatpush2.msra.mxu0 0.0
    %473 = vmatprep.subr.mxu0 0.0
    %474 = vmatpush2.msra.mxu0 0.0
    %475 = vmatprep.subr.mxu0 0.0
    %476 = vmatpush2.msra.mxu0 0.0
    %477 = vmatprep.subr.mxu0 0.0
    %478 = vmatpush2.msra.mxu0 0.0
    %479 = vmatprep.subr.mxu0 0.0
    %480 = vmatpush2.msra.mxu0 0.0
    %481 = vmatprep.subr.mxu0 0.0
    %482 = vmatpush2.msra.mxu0 0.0
    %483 = vmatprep.subr.mxu0 0.0
    %484 = vmatpush2.msra.mxu0 0.0
    %485 = vmatprep.subr.mxu0 0.0
    %486 = vmatpush2.msra.mxu0 0.0
    %487 = vmatprep.subr.mxu0 0.0
    %488 = vmatpush2.msra.mxu0 0.0
    %489 = vmatprep.subr.mxu0 0.0
    %490 = vmatpush2.msra.mxu0 0.0
    %491 = vmatprep.subr.mxu0 0.0
    %492 = vmatpush2.msra.mxu0 0.0
    %493 = vmatprep.subr.mxu0 0.0
    %494 = vmatpush2.msra.mxu0 0.0
    %495 = vmatprep.subr.mxu0 0.0
    %496 = vmatpush2.msra.mxu0 0.0
    %497 = vmatprep.mubr.f32.mxu0 0.0
    %498 = vmatmul.mubr.f32.gmra.mxu0 %v428
    %v499 = vpop.f32.mrf.mxu0
    %v500 = vadd.f32 %v418, %v499
    %v501 = vpop.f32.mrf.mxu0
    %502 = vmatprep.mubr.f32.mxu0 0.0
    %503 = vmatmul.mubr.f32.gmra.mxu0 %v431
    %v504 = vpop.f32.mrf.mxu0
    %v505 = vadd.f32 %v423, %v504
    %v506 = vpop.f32.mrf.mxu0
    %507 = vdwg.mxu0
    %v508 = vlaneseq
    %v509 = vshrl.u32 %v508, 7
    %v510 = vsub.s32 0, %v509
    %v511 = vrot.slane %v125, %v510
    %v512 = vadd.f32 %v500, %v511
    %v513 = vadd.f32 %v505, %v511
    %v514 = vmax.f32 %v512, 0.0
    %v515 = vmax.f32 %v513, 0.0
    %v516 = vld [vmem:[#allocation8] sm:$0xff]
    %v517 = vld [vmem:[#allocation8 + $0x8] sm:$0xff]
    %v518 = vld [vmem:[#allocation8 + $0x10] sm:$0xff]
    %v519 = vld [vmem:[#allocation8 + $0x18] sm:$0xff]
    %v520 = vlaneseq
    %v521 = vshrl.u32 %v520, 7
    %v522 = vsub.s32 1, %v521
    %v523 = vrot.slane %v125, %v522
    %v525 = vsel %vm146, %v514, 0
    %v528 = vsel %vm146, %v515, 0
    %530 = vmatprep.subr.mxu0 0.0
    %531 = vmatpush1.msra.mxu0 0.0
    %532 = vmatprep.subr.mxu0 0.0
    %533 = vmatpush1.msra.mxu0 0.0
    %534 = vmatprep.subr.mxu0 0.0
    %535 = vmatpush1.msra.mxu0 0.0
    %536 = vmatprep.subr.mxu0 0.0
    %537 = vmatpush1.msra.mxu0 0.0
    %538 = vmatprep.subr.mxu0 0.0
    %539 = vmatpush1.msra.mxu0 0.0
    %540 = vmatprep.subr.mxu0 0.0
    %541 = vmatpush1.msra.mxu0 0.0
    %542 = vmatprep.subr.mxu0 0.0
    %543 = vmatpush1.msra.mxu0 0.0
    %544 = vmatprep.subr.mxu0 0.0
    %545 = vmatpush1.msra.mxu0 0.0
    %546 = vmatprep.subr.mxu0 0.0
    %547 = vmatpush1.msra.mxu0 0.0
    %548 = vmatprep.subr.mxu0 0.0
    %549 = vmatpush1.msra.mxu0 0.0
    %550 = vmatprep.subr.mxu0 0.0
    %551 = vmatpush1.msra.mxu0 0.0
    %552 = vmatprep.subr.mxu0 0.0
    %553 = vmatpush1.msra.mxu0 0.0
    %554 = vmatprep.subr.mxu0 0.0
    %555 = vmatpush1.msra.mxu0 %v519
    %556 = vmatprep.subr.mxu0 0.0
    %557 = vmatpush1.msra.mxu0 %v518
    %558 = vmatprep.subr.mxu0 0.0
    %559 = vmatpush1.msra.mxu0 %v517
    %560 = vmatprep.subr.mxu0 0.0
    %561 = vmatpush1.msra.mxu0 %v516
    %562 = vmatprep.subr.mxu0 0.0
    %563 = vmatpush2.msra.mxu0 0.0
    %564 = vmatprep.subr.mxu0 0.0
    %565 = vmatpush2.msra.mxu0 0.0
    %566 = vmatprep.subr.mxu0 0.0
    %567 = vmatpush2.msra.mxu0 0.0
    %568 = vmatprep.subr.mxu0 0.0
    %569 = vmatpush2.msra.mxu0 0.0
    %570 = vmatprep.subr.mxu0 0.0
    %571 = vmatpush2.msra.mxu0 0.0
    %572 = vmatprep.subr.mxu0 0.0
    %573 = vmatpush2.msra.mxu0 0.0
    %574 = vmatprep.subr.mxu0 0.0
    %575 = vmatpush2.msra.mxu0 0.0
    %576 = vmatprep.subr.mxu0 0.0
    %577 = vmatpush2.msra.mxu0 0.0
    %578 = vmatprep.subr.mxu0 0.0
    %579 = vmatpush2.msra.mxu0 0.0
    %580 = vmatprep.subr.mxu0 0.0
    %581 = vmatpush2.msra.mxu0 0.0
    %582 = vmatprep.subr.mxu0 0.0
    %583 = vmatpush2.msra.mxu0 0.0
    %584 = vmatprep.subr.mxu0 0.0
    %585 = vmatpush2.msra.mxu0 0.0
    %586 = vmatprep.subr.mxu0 0.0
    %587 = vmatpush2.msra.mxu0 0.0
    %588 = vmatprep.subr.mxu0 0.0
    %589 = vmatpush2.msra.mxu0 0.0
    %590 = vmatprep.subr.mxu0 0.0
    %591 = vmatpush2.msra.mxu0 0.0
    %592 = vmatprep.subr.mxu0 0.0
    %593 = vmatpush2.msra.mxu0 0.0
    %594 = vmatprep.mubr.f32.mxu0 0.0
    %595 = vmatmul.mubr.f32.gmra.mxu0 %v525
    %v596 = vpop.f32.mrf.mxu0
    %v597 = vadd.f32 %v523, %v596
    %v598 = vpop.f32.mrf.mxu0
    %599 = vmatprep.mubr.f32.mxu0 0.0
    %600 = vmatmul.mubr.f32.gmra.mxu0 %v528
    %v601 = vpop.f32.mrf.mxu0
    %v602 = vadd.f32 %v523, %v601
    %v603 = vpop.f32.mrf.mxu0
    %604 = vdwg.mxu0
    %v605 = vsel %vm146, %v597, 0.0
    %v606 = vrot.slane %v605, 4
    %v607 = vadd.f32 %v605, %v606
    %v608 = vrot.slane %v607, 2
    %v609 = vadd.f32 %v607, %v608
    %v610 = vrot.slane %v609, 1
    %v611 = vadd.f32 %v609, %v610
    %v612 = vrcp.pop 8.0
    %v613 = vmul.f32 %v611, %v612
    %v614 = vsel %vm146, %v602, 0.0
    %v615 = vrot.slane %v614, 4
    %v616 = vadd.f32 %v614, %v615
    %v617 = vrot.slane %v616, 2
    %v618 = vadd.f32 %v616, %v617
    %v619 = vrot.slane %v618, 1
    %v620 = vadd.f32 %v618, %v619
    %v621 = vmul.f32 %v620, %v612
    %v622 = vsel %vm136, %v613, %v621
    %v623 = vadd.f32 %v324, %v622
    %v624 = vlaneseq
    %v625 = vshrl.u32 %v624, 7
    %v626 = vsub.s32 0, %v625
    %v627 = vrot.slane %v129, %v626
    %v628 = vlaneseq
    %v629 = vshrl.u32 %v628, 7
    %v630 = vsub.s32 0, %v629
    %v631 = vrot.slane %v132, %v630
    %v632 = vld [vmem:[%s3] sm:$0xff]
    %v633 = vld [vmem:[%s3 + $0x8] sm:$0xff]
    %v634 = vld [vmem:[%s3 + $0x10] sm:$0xff]
    %v635 = vld [vmem:[%s3 + $0x18] sm:$0xff]
    %640 = vrot.lane.b32.xlu0 %v632, 32
    %v641 = vpop.permute.xlu0 %640
    %642 = vrot.lane.b32.xlu0 %v633, 32
    %v643 = vpop.permute.xlu0 %642
    %644 = vrot.lane.b32.xlu0 %v634, 32
    %v645 = vpop.permute.xlu0 %644
    %646 = vrot.lane.b32.xlu0 %v635, 32
    %v647 = vpop.permute.xlu0 %646
    %v652 = vmul.f32 %v627, %v641
    %v653 = vmul.f32 %v627, %v643
    %v654 = vmul.f32 %v631, %v645
    %v655 = vmul.f32 %v631, %v647
    %v656 = vld [vmem:[%s4] sm:$0xff]
    %v657 = vld [vmem:[%s4 + $0x8] sm:$0xff]
    %v658 = vld [vmem:[%s4 + $0x10] sm:$0xff]
    %v659 = vld [vmem:[%s4 + $0x18] sm:$0xff]
    %664 = vrot.lane.b32.xlu0 %v656, 41
    %v665 = vpop.permute.xlu0 %664
    %666 = vrot.lane.b32.xlu0 %v657, 41
    %v667 = vpop.permute.xlu0 %666
    %668 = vrot.lane.b32.xlu0 %v658, 41
    %v669 = vpop.permute.xlu0 %668
    %670 = vrot.lane.b32.xlu0 %v659, 41
    %v671 = vpop.permute.xlu0 %670
    %v676 = vmul.f32 %v627, %v665
    %v677 = vmul.f32 %v627, %v667
    %v678 = vmul.f32 %v631, %v669
    %v679 = vmul.f32 %v631, %v671
    %684 = vrot.lane.b32.xlu0 %v676, 119
    %v685 = vpop.permute.xlu0 %684
    %686 = vrot.lane.b32.xlu0 %v677, 119
    %v687 = vpop.permute.xlu0 %686
    %688 = vrot.lane.b32.xlu0 %v678, 119
    %v689 = vpop.permute.xlu0 %688
    %690 = vrot.lane.b32.xlu0 %v679, 119
    %v691 = vpop.permute.xlu0 %690
    %v696 = vadd.f32 %v652, %v685
    %v697 = vadd.f32 %v653, %v687
    %v698 = vadd.f32 %v654, %v689
    %v699 = vadd.f32 %v655, %v691
    %v700 = vlaneseq
    %v701 = vshrl.u32 %v700, 7
    %v702 = vsub.s32 0, %v701
    %v703 = vrot.slane %v623, %v702
    %v704 = vlaneseq
    %v705 = vshrl.u32 %v704, 7
    %v706 = vsub.s32 1, %v705
    %v707 = vrot.slane %v623, %v706
    %v708 = vld [vmem:[%s11] sm:$0xff]
    %v709 = vld [vmem:[%s11 + $0x8] sm:$0x1]
    %v710 = vlaneseq
    %v711 = vshrl.u32 %v710, 7
    %v712 = vsub.s32 3, %v711
    %v713 = vrot.slane %v125, %v712
    %718 = vrot.lane.b32.xlu0 %v696, 96
    %v719 = vpop.permute.xlu0 %718
    %720 = vrot.lane.b32.xlu0 %v697, 96
    %v721 = vpop.permute.xlu0 %720
    %722 = vrot.lane.b32.xlu0 %v698, 96
    %v723 = vpop.permute.xlu0 %722
    %724 = vrot.lane.b32.xlu0 %v699, 96
    %v725 = vpop.permute.xlu0 %724
    %vm726 = vcmask 72704
    %v727 = vsel %vm726, %v719, 0
    %v729 = vsel %vm726, %v721, 0
    %v731 = vsel %vm726, %v723, 0
    %v733 = vsel %vm726, %v725, 0
    %v736 = vsel %vm136, %v709, 0
    %738 = vmatprep.subr.mxu0 0.0
    %739 = vmatpush1.msra.mxu0 0.0
    %740 = vmatprep.subr.mxu0 0.0
    %741 = vmatpush1.msra.mxu0 0.0
    %742 = vmatprep.subr.mxu0 0.0
    %743 = vmatpush1.msra.mxu0 0.0
    %744 = vmatprep.subr.mxu0 0.0
    %745 = vmatpush1.msra.mxu0 0.0
    %746 = vmatprep.subr.mxu0 0.0
    %747 = vmatpush1.msra.mxu0 0.0
    %748 = vmatprep.subr.mxu0 0.0
    %749 = vmatpush1.msra.mxu0 0.0
    %750 = vmatprep.subr.mxu0 0.0
    %751 = vmatpush1.msra.mxu0 0.0
    %752 = vmatprep.subr.mxu0 0.0
    %753 = vmatpush1.msra.mxu0 0.0
    %754 = vmatprep.subr.mxu0 0.0
    %755 = vmatpush1.msra.mxu0 0.0
    %756 = vmatprep.subr.mxu0 0.0
    %757 = vmatpush1.msra.mxu0 0.0
    %758 = vmatprep.subr.mxu0 0.0
    %759 = vmatpush1.msra.mxu0 0.0
    %760 = vmatprep.subr.mxu0 0.0
    %761 = vmatpush1.msra.mxu0 0.0
    %762 = vmatprep.subr.mxu0 0.0
    %763 = vmatpush1.msra.mxu0 0.0
    %764 = vmatprep.subr.mxu0 0.0
    %765 = vmatpush1.msra.mxu0 0.0
    %766 = vmatprep.subr.mxu0 0.0
    %767 = vmatpush1.msra.mxu0 %v736
    %768 = vmatprep.subr.mxu0 0.0
    %769 = vmatpush1.msra.mxu0 %v708
    %770 = vmatprep.subr.mxu0 0.0
    %771 = vmatpush2.msra.mxu0 0.0
    %772 = vmatprep.subr.mxu0 0.0
    %773 = vmatpush2.msra.mxu0 0.0
    %774 = vmatprep.subr.mxu0 0.0
    %775 = vmatpush2.msra.mxu0 0.0
    %776 = vmatprep.subr.mxu0 0.0
    %777 = vmatpush2.msra.mxu0 0.0
    %778 = vmatprep.subr.mxu0 0.0
    %779 = vmatpush2.msra.mxu0 0.0
    %780 = vmatprep.subr.mxu0 0.0
    %781 = vmatpush2.msra.mxu0 0.0
    %782 = vmatprep.subr.mxu0 0.0
    %783 = vmatpush2.msra.mxu0 0.0
    %784 = vmatprep.subr.mxu0 0.0
    %785 = vmatpush2.msra.mxu0 0.0
    %786 = vmatprep.subr.mxu0 0.0
    %787 = vmatpush2.msra.mxu0 0.0
    %788 = vmatprep.subr.mxu0 0.0
    %789 = vmatpush2.msra.mxu0 0.0
    %790 = vmatprep.subr.mxu0 0.0
    %791 = vmatpush2.msra.mxu0 0.0
    %792 = vmatprep.subr.mxu0 0.0
    %793 = vmatpush2.msra.mxu0 0.0
    %794 = vmatprep.subr.mxu0 0.0
    %795 = vmatpush2.msra.mxu0 0.0
    %796 = vmatprep.subr.mxu0 0.0
    %797 = vmatpush2.msra.mxu0 0.0
    %798 = vmatprep.subr.mxu0 0.0
    %799 = vmatpush2.msra.mxu0 0.0
    %800 = vmatprep.subr.mxu0 0.0
    %801 = vmatpush2.msra.mxu0 0.0
    %802 = vmatprep.mubr.f32.mxu0 0.0
    %803 = vmatmul.mubr.f32.gmra.mxu0 %v727
    %v804 = vpop.f32.mrf.mxu0
    %v805 = vadd.f32 %v713, %v804
    %v806 = vpop.f32.mrf.mxu0
    %807 = vmatprep.mubr.f32.mxu0 0.0
    %808 = vmatmul.mubr.f32.gmra.mxu0 %v729
    %v809 = vpop.f32.mrf.mxu0
    %v810 = vadd.f32 %v713, %v809
    %v811 = vpop.f32.mrf.mxu0
    %812 = vmatprep.mubr.f32.mxu0 0.0
    %813 = vmatmul.mubr.f32.gmra.mxu0 %v731
    %v814 = vpop.f32.mrf.mxu0
    %v815 = vadd.f32 %v713, %v814
    %v816 = vpop.f32.mrf.mxu0
    %817 = vmatprep.mubr.f32.mxu0 0.0
    %818 = vmatmul.mubr.f32.gmra.mxu0 %v733
    %v819 = vpop.f32.mrf.mxu0
    %v820 = vadd.f32 %v713, %v819
    %v821 = vpop.f32.mrf.mxu0
    %822 = vdwg.mxu0
    %v823 = vadd.f32 %v805, %v703
    %v824 = vadd.f32 %v810, %v703
    %v825 = vadd.f32 %v815, %v707
    %v826 = vadd.f32 %v820, %v707
    %v827 = vlaneseq
    %v828 = vshrl.u32 %v827, 7
    %v829 = vadd.s32 %v828, 8
    %v830 = vadd.s32 %v828, 16
    %v831 = vadd.s32 %v828, 24
    %vm832 = vcmp.lt.s32.totalorder %v828, 0
    %v833 = vsub.s32 0, %v828
    %v834 = vsel %vm832, %v833, %v828
    %v835 = vshrl.u32 %v834, 4
    %v836 = vand.u32 %v834, 15
    %v837 = vsub.s32 0, %v836
    %v838 = vsel %vm832, %v837, %v836
    %vm839 = vcmp.lt.s32.totalorder %v829, 0
    %v840 = vsub.s32 0, %v829
    %v841 = vsel %vm839, %v840, %v829
    %v842 = vshrl.u32 %v841, 4
    %v843 = vand.u32 %v841, 15
    %v844 = vsub.s32 0, %v843
    %v845 = vsel %vm839, %v844, %v843
    %vm846 = vcmp.lt.s32.totalorder %v830, 0
    %v847 = vsub.s32 0, %v830
    %v848 = vsel %vm846, %v847, %v830
    %v849 = vshrl.u32 %v848, 4
    %v850 = vand.u32 %v848, 15
    %v851 = vsub.s32 0, %v850
    %v852 = vsel %vm846, %v851, %v850
    %vm853 = vcmp.lt.s32.totalorder %v831, 0
    %v854 = vsub.s32 0, %v831
    %v855 = vsel %vm853, %v854, %v831
    %v856 = vshrl.u32 %v855, 4
    %v857 = vand.u32 %v855, 15
    %v858 = vsub.s32 0, %v857
    %v859 = vsel %vm853, %v858, %v857
    %vm860 = vcmp.ne.s32.totalorder %v838, 0
    %vm861 = vcmp.ne.s32.totalorder %v845, 0
    %vm862 = vcmp.ne.s32.totalorder %v852, 0
    %vm863 = vcmp.ne.s32.totalorder %v859, 0
    %vm864 = vcmp.lt.s32.totalorder %v838, 0
    %vm865 = vcmp.lt.s32.totalorder %v845, 0
    %vm866 = vcmp.lt.s32.totalorder %v852, 0
    %vm867 = vcmp.lt.s32.totalorder %v859, 0
    %vm868 = vmand %vm864, %vm860
    %vm869 = vmand %vm865, %vm861
    %vm870 = vmand %vm866, %vm862
    %vm871 = vmand %vm867, %vm863
    %v872 = vadd.s32 %v838, 16
    %v873 = vadd.s32 %v845, 16
    %v874 = vadd.s32 %v852, 16
    %v875 = vadd.s32 %v859, 16
    %v876 = vsel %vm868, %v872, %v838
    %v877 = vsel %vm869, %v873, %v845
    %v878 = vsel %vm870, %v874, %v852
    %v879 = vsel %vm871, %v875, %v859
    %vm880 = vcmp.eq.s32.totalorder %v876, 0
    %vm881 = vcmp.eq.s32.totalorder %v877, 0
    %vm882 = vcmp.eq.s32.totalorder %v878, 0
    %vm883 = vcmp.eq.s32.totalorder %v879, 0
    %v884 = vrot.slane %v823, 7
    %v885 = vrot.slane %v824, 7
    %v886 = vrot.slane %v825, 7
    %v887 = vrot.slane %v826, 7
    %vm888 = vcmp.lt.s32.totalorder %v828, 1
    %v889 = vsel %vm888, %v886, %v887
    %v890 = vsel %vm888, %v885, %v886
    %v891 = vsel %vm888, %v884, %v885
    %v892 = vsel %vm888, %v887, %v884
    %v893 = vsel %vm880, 1, 0
    %v894 = vsel %vm881, 1, 0
    %v895 = vsel %vm882, 1, 0
    %v896 = vsel %vm883, 1, 0
    %vm897 = vcmp.eq.s32.totalorder %v893, 1
    %vm898 = vcmp.eq.s32.totalorder %v894, 1
    %vm899 = vcmp.eq.s32.totalorder %v895, 1
    %vm900 = vcmp.eq.s32.totalorder %v896, 1
    %v901 = vsel %vm897, 0.0, %v892
    %v902 = vsel %vm898, 0.0, %v891
    %v903 = vsel %vm899, 0.0, %v890
    %v904 = vsel %vm900, 0.0, %v889
    %vm905 = vcmp.eq.s32.totalorder %v876, 15
    %vm906 = vcmp.eq.s32.totalorder %v877, 15
    %vm907 = vcmp.eq.s32.totalorder %v878, 15
    %vm908 = vcmp.eq.s32.totalorder %v879, 15
    %v909 = vrot.slane %v823, 1
    %v910 = vrot.slane %v824, 1
    %v911 = vrot.slane %v825, 1
    %v912 = vrot.slane %v826, 1
    %vm913 = vcmp.lt.s32.totalorder %v828, 7
    %v914 = vsel %vm913, %v911, %v912
    %v915 = vsel %vm913, %v910, %v911
    %v916 = vsel %vm913, %v909, %v910
    %v917 = vsel %vm913, %v912, %v909
    %v918 = vsel %vm905, 1, 0
    %v919 = vsel %vm906, 1, 0
    %v920 = vsel %vm907, 1, 0
    %v921 = vsel %vm908, 1, 0
    %vm922 = vcmp.eq.s32.totalorder %v918, 1
    %vm923 = vcmp.eq.s32.totalorder %v919, 1
    %vm924 = vcmp.eq.s32.totalorder %v920, 1
    %vm925 = vcmp.eq.s32.totalorder %v921, 1
    %v926 = vsel %vm922, 0.0, %v916
    %v927 = vsel %vm923, 0.0, %v915
    %v928 = vsel %vm924, 0.0, %v914
    %v929 = vsel %vm925, 0.0, %v917
    %v930 = vld [vmem:[%s12] sm:$0xff]
    %v931 = vld [vmem:[%s12 + $0x8] sm:$0xff]
    %v932 = vld [vmem:[%s12 + $0x10] sm:$0xff]
    %v933 = vld [vmem:[%s12 + $0x18] sm:$0xff]
    %v934 = vld [vmem:[%s12 + $0x20] sm:$0xff]
    %v935 = vld [vmem:[%s12 + $0x28] sm:$0xff]
    %v936 = vld [vmem:[%s12 + $0x30] sm:$0xff]
    %v937 = vld [vmem:[%s12 + $0x38] sm:$0xff]
    %v938 = vld [vmem:[%s12 + $0x40] sm:$0xff]
    %v939 = vld [vmem:[%s12 + $0x48] sm:$0xff]
    %v940 = vld [vmem:[%s12 + $0x50] sm:$0xff]
    %v941 = vld [vmem:[%s12 + $0x58] sm:$0xff]
    %v943 = vsel %vm146, %v823, 0
    %v946 = vsel %vm146, %v824, 0
    %v949 = vsel %vm146, %v825, 0
    %v952 = vsel %vm146, %v826, 0
    %954 = vmatprep.subr.mxu0 0.0
    %955 = vmatpush1.msra.mxu0 0.0
    %956 = vmatprep.subr.mxu0 0.0
    %957 = vmatpush1.msra.mxu0 0.0
    %958 = vmatprep.subr.mxu0 0.0
    %959 = vmatpush1.msra.mxu0 0.0
    %960 = vmatprep.subr.mxu0 0.0
    %961 = vmatpush1.msra.mxu0 0.0
    %962 = vmatprep.subr.mxu0 0.0
    %963 = vmatpush1.msra.mxu0 0.0
    %964 = vmatprep.subr.mxu0 0.0
    %965 = vmatpush1.msra.mxu0 0.0
    %966 = vmatprep.subr.mxu0 0.0
    %967 = vmatpush1.msra.mxu0 0.0
    %968 = vmatprep.subr.mxu0 0.0
    %969 = vmatpush1.msra.mxu0 0.0
    %970 = vmatprep.subr.mxu0 0.0
    %971 = vmatpush1.msra.mxu0 0.0
    %972 = vmatprep.subr.mxu0 0.0
    %973 = vmatpush1.msra.mxu0 0.0
    %974 = vmatprep.subr.mxu0 0.0
    %975 = vmatpush1.msra.mxu0 0.0
    %976 = vmatprep.subr.mxu0 0.0
    %977 = vmatpush1.msra.mxu0 0.0
    %978 = vmatprep.subr.mxu0 0.0
    %979 = vmatpush1.msra.mxu0 %v937
    %980 = vmatprep.subr.mxu0 0.0
    %981 = vmatpush1.msra.mxu0 %v936
    %982 = vmatprep.subr.mxu0 0.0
    %983 = vmatpush1.msra.mxu0 %v935
    %984 = vmatprep.subr.mxu0 0.0
    %985 = vmatpush1.msra.mxu0 %v934
    %986 = vmatprep.subr.mxu0 0.0
    %987 = vmatpush2.msra.mxu0 0.0
    %988 = vmatprep.subr.mxu0 0.0
    %989 = vmatpush2.msra.mxu0 0.0
    %990 = vmatprep.subr.mxu0 0.0
    %991 = vmatpush2.msra.mxu0 0.0
    %992 = vmatprep.subr.mxu0 0.0
    %993 = vmatpush2.msra.mxu0 0.0
    %994 = vmatprep.subr.mxu0 0.0
    %995 = vmatpush2.msra.mxu0 0.0
    %996 = vmatprep.subr.mxu0 0.0
    %997 = vmatpush2.msra.mxu0 0.0
    %998 = vmatprep.subr.mxu0 0.0
    %999 = vmatpush2.msra.mxu0 0.0
    %1000 = vmatprep.subr.mxu0 0.0
    %1001 = vmatpush2.msra.mxu0 0.0
    %1002 = vmatprep.subr.mxu0 0.0
    %1003 = vmatpush2.msra.mxu0 0.0
    %1004 = vmatprep.subr.mxu0 0.0
    %1005 = vmatpush2.msra.mxu0 0.0
    %1006 = vmatprep.subr.mxu0 0.0
    %1007 = vmatpush2.msra.mxu0 0.0
    %1008 = vmatprep.subr.mxu0 0.0
    %1009 = vmatpush2.msra.mxu0 0.0
    %1010 = vmatprep.subr.mxu0 0.0
    %1011 = vmatpush2.msra.mxu0 0.0
    %1012 = vmatprep.subr.mxu0 0.0
    %1013 = vmatpush2.msra.mxu0 0.0
    %1014 = vmatprep.subr.mxu0 0.0
    %1015 = vmatpush2.msra.mxu0 0.0
    %1016 = vmatprep.subr.mxu0 0.0
    %1017 = vmatpush2.msra.mxu0 0.0
    %1018 = vmatprep.mubr.f32.mxu0 0.0
    %1019 = vmatmul.mubr.f32.gmra.mxu0 %v943
    %v1020 = vpop.f32.mrf.mxu0
    %v1021 = vadd.f32 0.0, %v1020
    %v1022 = vpop.f32.mrf.mxu0
    %1023 = vmatprep.mubr.f32.mxu0 0.0
    %1024 = vmatmul.mubr.f32.gmra.mxu0 %v946
    %v1025 = vpop.f32.mrf.mxu0
    %v1026 = vadd.f32 0.0, %v1025
    %v1027 = vpop.f32.mrf.mxu0
    %1028 = vmatprep.mubr.f32.mxu0 0.0
    %1029 = vmatmul.mubr.f32.gmra.mxu0 %v949
    %v1030 = vpop.f32.mrf.mxu0
    %v1031 = vadd.f32 0.0, %v1030
    %v1032 = vpop.f32.mrf.mxu0
    %1033 = vmatprep.mubr.f32.mxu0 0.0
    %1034 = vmatmul.mubr.f32.gmra.mxu0 %v952
    %v1035 = vpop.f32.mrf.mxu0
    %v1036 = vadd.f32 0.0, %v1035
    %v1037 = vpop.f32.mrf.mxu0
    %1038 = vdwg.mxu0
    %v1040 = vsel %vm146, %v901, 0
    %v1043 = vsel %vm146, %v902, 0
    %v1046 = vsel %vm146, %v903, 0
    %v1049 = vsel %vm146, %v904, 0
    %1051 = vmatprep.subr.mxu0 0.0
    %1052 = vmatpush1.msra.mxu0 0.0
    %1053 = vmatprep.subr.mxu0 0.0
    %1054 = vmatpush1.msra.mxu0 0.0
    %1055 = vmatprep.subr.mxu0 0.0
    %1056 = vmatpush1.msra.mxu0 0.0
    %1057 = vmatprep.subr.mxu0 0.0
    %1058 = vmatpush1.msra.mxu0 0.0
    %1059 = vmatprep.subr.mxu0 0.0
    %1060 = vmatpush1.msra.mxu0 0.0
    %1061 = vmatprep.subr.mxu0 0.0
    %1062 = vmatpush1.msra.mxu0 0.0
    %1063 = vmatprep.subr.mxu0 0.0
    %1064 = vmatpush1.msra.mxu0 0.0
    %1065 = vmatprep.subr.mxu0 0.0
    %1066 = vmatpush1.msra.mxu0 0.0
    %1067 = vmatprep.subr.mxu0 0.0
    %1068 = vmatpush1.msra.mxu0 0.0
    %1069 = vmatprep.subr.mxu0 0.0
    %1070 = vmatpush1.msra.mxu0 0.0
    %1071 = vmatprep.subr.mxu0 0.0
    %1072 = vmatpush1.msra.mxu0 0.0
    %1073 = vmatprep.subr.mxu0 0.0
    %1074 = vmatpush1.msra.mxu0 0.0
    %1075 = vmatprep.subr.mxu0 0.0
    %1076 = vmatpush1.msra.mxu0 %v933
    %1077 = vmatprep.subr.mxu0 0.0
    %1078 = vmatpush1.msra.mxu0 %v932
    %1079 = vmatprep.subr.mxu0 0.0
    %1080 = vmatpush1.msra.mxu0 %v931
    %1081 = vmatprep.subr.mxu0 0.0
    %1082 = vmatpush1.msra.mxu0 %v930
    %1083 = vmatprep.subr.mxu0 0.0
    %1084 = vmatpush2.msra.mxu0 0.0
    %1085 = vmatprep.subr.mxu0 0.0
    %1086 = vmatpush2.msra.mxu0 0.0
    %1087 = vmatprep.subr.mxu0 0.0
    %1088 = vmatpush2.msra.mxu0 0.0
    %1089 = vmatprep.subr.mxu0 0.0
    %1090 = vmatpush2.msra.mxu0 0.0
    %1091 = vmatprep.subr.mxu0 0.0
    %1092 = vmatpush2.msra.mxu0 0.0
    %1093 = vmatprep.subr.mxu0 0.0
    %1094 = vmatpush2.msra.mxu0 0.0
    %1095 = vmatprep.subr.mxu0 0.0
    %1096 = vmatpush2.msra.mxu0 0.0
    %1097 = vmatprep.subr.mxu0 0.0
    %1098 = vmatpush2.msra.mxu0 0.0
    %1099 = vmatprep.subr.mxu0 0.0
    %1100 = vmatpush2.msra.mxu0 0.0
    %1101 = vmatprep.subr.mxu0 0.0
    %1102 = vmatpush2.msra.mxu0 0.0
    %1103 = vmatprep.subr.mxu0 0.0
    %1104 = vmatpush2.msra.mxu0 0.0
    %1105 = vmatprep.subr.mxu0 0.0
    %1106 = vmatpush2.msra.mxu0 0.0
    %1107 = vmatprep.subr.mxu0 0.0
    %1108 = vmatpush2.msra.mxu0 0.0
    %1109 = vmatprep.subr.mxu0 0.0
    %1110 = vmatpush2.msra.mxu0 0.0
    %1111 = vmatprep.subr.mxu0 0.0
    %1112 = vmatpush2.msra.mxu0 0.0
    %1113 = vmatprep.subr.mxu0 0.0
    %1114 = vmatpush2.msra.mxu0 0.0
    %1115 = vmatprep.mubr.f32.mxu0 0.0
    %1116 = vmatmul.mubr.f32.gmra.mxu0 %v1040
    %v1117 = vpop.f32.mrf.mxu0
    %v1118 = vadd.f32 %v1021, %v1117
    %v1119 = vpop.f32.mrf.mxu0
    %1120 = vmatprep.mubr.f32.mxu0 0.0
    %1121 = vmatmul.mubr.f32.gmra.mxu0 %v1043
    %v1122 = vpop.f32.mrf.mxu0
    %v1123 = vadd.f32 %v1026, %v1122
    %v1124 = vpop.f32.mrf.mxu0
    %1125 = vmatprep.mubr.f32.mxu0 0.0
    %1126 = vmatmul.mubr.f32.gmra.mxu0 %v1046
    %v1127 = vpop.f32.mrf.mxu0
    %v1128 = vadd.f32 %v1031, %v1127
    %v1129 = vpop.f32.mrf.mxu0
    %1130 = vmatprep.mubr.f32.mxu0 0.0
    %1131 = vmatmul.mubr.f32.gmra.mxu0 %v1049
    %v1132 = vpop.f32.mrf.mxu0
    %v1133 = vadd.f32 %v1036, %v1132
    %v1134 = vpop.f32.mrf.mxu0
    %1135 = vdwg.mxu0
    %v1137 = vsel %vm146, %v926, 0
    %v1140 = vsel %vm146, %v927, 0
    %v1143 = vsel %vm146, %v928, 0
    %v1146 = vsel %vm146, %v929, 0
    %1148 = vmatprep.subr.mxu0 0.0
    %1149 = vmatpush1.msra.mxu0 0.0
    %1150 = vmatprep.subr.mxu0 0.0
    %1151 = vmatpush1.msra.mxu0 0.0
    %1152 = vmatprep.subr.mxu0 0.0
    %1153 = vmatpush1.msra.mxu0 0.0
    %1154 = vmatprep.subr.mxu0 0.0
    %1155 = vmatpush1.msra.mxu0 0.0
    %1156 = vmatprep.subr.mxu0 0.0
    %1157 = vmatpush1.msra.mxu0 0.0
    %1158 = vmatprep.subr.mxu0 0.0
    %1159 = vmatpush1.msra.mxu0 0.0
    %1160 = vmatprep.subr.mxu0 0.0
    %1161 = vmatpush1.msra.mxu0 0.0
    %1162 = vmatprep.subr.mxu0 0.0
    %1163 = vmatpush1.msra.mxu0 0.0
    %1164 = vmatprep.subr.mxu0 0.0
    %1165 = vmatpush1.msra.mxu0 0.0
    %1166 = vmatprep.subr.mxu0 0.0
    %1167 = vmatpush1.msra.mxu0 0.0
    %1168 = vmatprep.subr.mxu0 0.0
    %1169 = vmatpush1.msra.mxu0 0.0
    %1170 = vmatprep.subr.mxu0 0.0
    %1171 = vmatpush1.msra.mxu0 0.0
    %1172 = vmatprep.subr.mxu0 0.0
    %1173 = vmatpush1.msra.mxu0 %v941
    %1174 = vmatprep.subr.mxu0 0.0
    %1175 = vmatpush1.msra.mxu0 %v940
    %1176 = vmatprep.subr.mxu0 0.0
    %1177 = vmatpush1.msra.mxu0 %v939
    %1178 = vmatprep.subr.mxu0 0.0
    %1179 = vmatpush1.msra.mxu0 %v938
    %1180 = vmatprep.subr.mxu0 0.0
    %1181 = vmatpush2.msra.mxu0 0.0
    %1182 = vmatprep.subr.mxu0 0.0
    %1183 = vmatpush2.msra.mxu0 0.0
    %1184 = vmatprep.subr.mxu0 0.0
    %1185 = vmatpush2.msra.mxu0 0.0
    %1186 = vmatprep.subr.mxu0 0.0
    %1187 = vmatpush2.msra.mxu0 0.0
    %1188 = vmatprep.subr.mxu0 0.0
    %1189 = vmatpush2.msra.mxu0 0.0
    %1190 = vmatprep.subr.mxu0 0.0
    %1191 = vmatpush2.msra.mxu0 0.0
    %1192 = vmatprep.subr.mxu0 0.0
    %1193 = vmatpush2.msra.mxu0 0.0
    %1194 = vmatprep.subr.mxu0 0.0
    %1195 = vmatpush2.msra.mxu0 0.0
    %1196 = vmatprep.subr.mxu0 0.0
    %1197 = vmatpush2.msra.mxu0 0.0
    %1198 = vmatprep.subr.mxu0 0.0
    %1199 = vmatpush2.msra.mxu0 0.0
    %1200 = vmatprep.subr.mxu0 0.0
    %1201 = vmatpush2.msra.mxu0 0.0
    %1202 = vmatprep.subr.mxu0 0.0
    %1203 = vmatpush2.msra.mxu0 0.0
    %1204 = vmatprep.subr.mxu0 0.0
    %1205 = vmatpush2.msra.mxu0 0.0
    %1206 = vmatprep.subr.mxu0 0.0
    %1207 = vmatpush2.msra.mxu0 0.0
    %1208 = vmatprep.subr.mxu0 0.0
    %1209 = vmatpush2.msra.mxu0 0.0
    %1210 = vmatprep.subr.mxu0 0.0
    %1211 = vmatpush2.msra.mxu0 0.0
    %1212 = vmatprep.mubr.f32.mxu0 0.0
    %1213 = vmatmul.mubr.f32.gmra.mxu0 %v1137
    %v1214 = vpop.f32.mrf.mxu0
    %v1215 = vadd.f32 0.0, %v1214
    %v1216 = vpop.f32.mrf.mxu0
    %1217 = vmatprep.mubr.f32.mxu0 0.0
    %1218 = vmatmul.mubr.f32.gmra.mxu0 %v1140
    %v1219 = vpop.f32.mrf.mxu0
    %v1220 = vadd.f32 0.0, %v1219
    %v1221 = vpop.f32.mrf.mxu0
    %1222 = vmatprep.mubr.f32.mxu0 0.0
    %1223 = vmatmul.mubr.f32.gmra.mxu0 %v1143
    %v1224 = vpop.f32.mrf.mxu0
    %v1225 = vadd.f32 0.0, %v1224
    %v1226 = vpop.f32.mrf.mxu0
    %1227 = vmatprep.mubr.f32.mxu0 0.0
    %1228 = vmatmul.mubr.f32.gmra.mxu0 %v1146
    %v1229 = vpop.f32.mrf.mxu0
    %v1230 = vadd.f32 0.0, %v1229
    %v1231 = vpop.f32.mrf.mxu0
    %1232 = vdwg.mxu0
    %v1233 = vadd.f32 %v1118, %v1215
    %v1234 = vadd.f32 %v1123, %v1220
    %v1235 = vadd.f32 %v1128, %v1225
    %v1236 = vadd.f32 %v1133, %v1230
    %v1237 = vlaneseq
    %v1238 = vshrl.u32 %v1237, 7
    %v1239 = vsub.s32 4, %v1238
    %v1240 = vrot.slane %v125, %v1239
    %v1241 = vadd.f32 %v1233, %v1240
    %v1242 = vadd.f32 %v1234, %v1240
    %v1243 = vadd.f32 %v1235, %v1240
    %v1244 = vadd.f32 %v1236, %v1240
    %v1245 = vand.u32 2147483647, %v1241
    %v1246 = vand.u32 2147483647, %v1242
    %v1247 = vand.u32 2147483647, %v1243
    %v1248 = vand.u32 2147483647, %v1244
    %v1249 = vsub.f32 0.0, %v1245
    %v1250 = vsub.f32 0.0, %v1246
    %v1251 = vsub.f32 0.0, %v1247
    %v1252 = vsub.f32 0.0, %v1248
    %v1253 = vmul.f32 %v1249, 1.442695
    %v1254 = vpow.pop %v1253
    %v1255 = vmul.f32 %v1250, 1.442695
    %v1256 = vpow.pop %v1255
    %v1257 = vmul.f32 %v1251, 1.442695
    %v1258 = vpow.pop %v1257
    %v1259 = vmul.f32 %v1252, 1.442695
    %v1260 = vpow.pop %v1259
    %v1261 = vadd.f32 %v1254, 1.0
    %v1262 = vlog2.pop %v1261
    %v1263 = vmul.f32 %v1262, 0.6931472
    %v1264 = vmul.f32 -0.5, %v1254
    %v1265 = vadd.f32 %v1264, 1.0
    %v1266 = vmul.f32 %v1265, %v1254
    %v1267 = vand.u32 2147483647, %v1254
    %vm1268 = vcmp.lt.f32.partialorder %v1267, 0.0004427343
    %v1269 = vsel %vm1268, %v1266, %v1263
    %v1270 = vadd.f32 %v1256, 1.0
    %v1271 = vlog2.pop %v1270
    %v1272 = vmul.f32 %v1271, 0.6931472
    %v1273 = vmul.f32 -0.5, %v1256
    %v1274 = vadd.f32 %v1273, 1.0
    %v1275 = vmul.f32 %v1274, %v1256
    %v1276 = vand.u32 2147483647, %v1256
    %vm1277 = vcmp.lt.f32.partialorder %v1276, 0.0004427343
    %v1278 = vsel %vm1277, %v1275, %v1272
    %v1279 = vadd.f32 %v1258, 1.0
    %v1280 = vlog2.pop %v1279
    %v1281 = vmul.f32 %v1280, 0.6931472
    %v1282 = vmul.f32 -0.5, %v1258
    %v1283 = vadd.f32 %v1282, 1.0
    %v1284 = vmul.f32 %v1283, %v1258
    %v1285 = vand.u32 2147483647, %v1258
    %vm1286 = vcmp.lt.f32.partialorder %v1285, 0.0004427343
    %v1287 = vsel %vm1286, %v1284, %v1281
    %v1288 = vadd.f32 %v1260, 1.0
    %v1289 = vlog2.pop %v1288
    %v1290 = vmul.f32 %v1289, 0.6931472
    %v1291 = vmul.f32 -0.5, %v1260
    %v1292 = vadd.f32 %v1291, 1.0
    %v1293 = vmul.f32 %v1292, %v1260
    %v1294 = vand.u32 2147483647, %v1260
    %vm1295 = vcmp.lt.f32.partialorder %v1294, 0.0004427343
    %v1296 = vsel %vm1295, %v1293, %v1290
    %v1297 = vmax.f32 %v1241, 0.0
    %v1298 = vmax.f32 %v1242, 0.0
    %v1299 = vmax.f32 %v1243, 0.0
    %v1300 = vmax.f32 %v1244, 0.0
    %v1301 = vadd.f32 %v1269, %v1297
    %v1302 = vadd.f32 %v1278, %v1298
    %v1303 = vadd.f32 %v1287, %v1299
    %v1304 = vadd.f32 %v1296, %v1300
    %v1305 = vtanh.pop %v1301
    %v1306 = vtanh.pop %v1302
    %v1307 = vtanh.pop %v1303
    %v1308 = vtanh.pop %v1304
    %v1309 = vmul.f32 %v1241, %v1305
    %v1310 = vmul.f32 %v1242, %v1306
    %v1311 = vmul.f32 %v1243, %v1307
    %v1312 = vmul.f32 %v1244, %v1308
    %v1313 = vadd.f32 %v1309, %v823
    %v1314 = vadd.f32 %v1310, %v824
    %v1315 = vadd.f32 %v1311, %v825
    %v1316 = vadd.f32 %v1312, %v826
    %v1317 = vld [vmem:[#allocation11] sm:$0xff]
    %v1318 = vld [vmem:[#allocation11 + $0x8] sm:$0xff]
    %v1319 = vld [vmem:[#allocation11 + $0x10] sm:$0xff]
    %v1320 = vld [vmem:[#allocation11 + $0x18] sm:$0xff]
    %v1321 = vlaneseq
    %v1322 = vshrl.u32 %v1321, 7
    %v1323 = vsub.s32 1, %v1322
    %v1324 = vrot.slane %v126, %v1323
    %v1326 = vsel %vm146, %v1313, 0
    %v1329 = vsel %vm146, %v1314, 0
    %v1332 = vsel %vm146, %v1315, 0
    %v1335 = vsel %vm146, %v1316, 0
    %1337 = vmatprep.subr.mxu0 0.0
    %1338 = vmatpush1.msra.mxu0 0.0
    %1339 = vmatprep.subr.mxu0 0.0
    %1340 = vmatpush1.msra.mxu0 0.0
    %1341 = vmatprep.subr.mxu0 0.0
    %1342 = vmatpush1.msra.mxu0 0.0
    %1343 = vmatprep.subr.mxu0 0.0
    %1344 = vmatpush1.msra.mxu0 0.0
    %1345 = vmatprep.subr.mxu0 0.0
    %1346 = vmatpush1.msra.mxu0 0.0
    %1347 = vmatprep.subr.mxu0 0.0
    %1348 = vmatpush1.msra.mxu0 0.0
    %1349 = vmatprep.subr.mxu0 0.0
    %1350 = vmatpush1.msra.mxu0 0.0
    %1351 = vmatprep.subr.mxu0 0.0
    %1352 = vmatpush1.msra.mxu0 0.0
    %1353 = vmatprep.subr.mxu0 0.0
    %1354 = vmatpush1.msra.mxu0 0.0
    %1355 = vmatprep.subr.mxu0 0.0
    %1356 = vmatpush1.msra.mxu0 0.0
    %1357 = vmatprep.subr.mxu0 0.0
    %1358 = vmatpush1.msra.mxu0 0.0
    %1359 = vmatprep.subr.mxu0 0.0
    %1360 = vmatpush1.msra.mxu0 0.0
    %1361 = vmatprep.subr.mxu0 0.0
    %1362 = vmatpush1.msra.mxu0 %v1320
    %1363 = vmatprep.subr.mxu0 0.0
    %1364 = vmatpush1.msra.mxu0 %v1319
    %1365 = vmatprep.subr.mxu0 0.0
    %1366 = vmatpush1.msra.mxu0 %v1318
    %1367 = vmatprep.subr.mxu0 0.0
    %1368 = vmatpush1.msra.mxu0 %v1317
    %1369 = vmatprep.subr.mxu0 0.0
    %1370 = vmatpush2.msra.mxu0 0.0
    %1371 = vmatprep.subr.mxu0 0.0
    %1372 = vmatpush2.msra.mxu0 0.0
    %1373 = vmatprep.subr.mxu0 0.0
    %1374 = vmatpush2.msra.mxu0 0.0
    %1375 = vmatprep.subr.mxu0 0.0
    %1376 = vmatpush2.msra.mxu0 0.0
    %1377 = vmatprep.subr.mxu0 0.0
    %1378 = vmatpush2.msra.mxu0 0.0
    %1379 = vmatprep.subr.mxu0 0.0
    %1380 = vmatpush2.msra.mxu0 0.0
    %1381 = vmatprep.subr.mxu0 0.0
    %1382 = vmatpush2.msra.mxu0 0.0
    %1383 = vmatprep.subr.mxu0 0.0
    %1384 = vmatpush2.msra.mxu0 0.0
    %1385 = vmatprep.subr.mxu0 0.0
    %1386 = vmatpush2.msra.mxu0 0.0
    %1387 = vmatprep.subr.mxu0 0.0
    %1388 = vmatpush2.msra.mxu0 0.0
    %1389 = vmatprep.subr.mxu0 0.0
    %1390 = vmatpush2.msra.mxu0 0.0
    %1391 = vmatprep.subr.mxu0 0.0
    %1392 = vmatpush2.msra.mxu0 0.0
    %1393 = vmatprep.subr.mxu0 0.0
    %1394 = vmatpush2.msra.mxu0 0.0
    %1395 = vmatprep.subr.mxu0 0.0
    %1396 = vmatpush2.msra.mxu0 0.0
    %1397 = vmatprep.subr.mxu0 0.0
    %1398 = vmatpush2.msra.mxu0 0.0
    %1399 = vmatprep.subr.mxu0 0.0
    %1400 = vmatpush2.msra.mxu0 0.0
    %1401 = vmatprep.mubr.f32.mxu0 0.0
    %1402 = vmatmul.mubr.f32.gmra.mxu0 %v1326
    %v1403 = vpop.f32.mrf.mxu0
    %v1404 = vadd.f32 %v1324, %v1403
    %v1405 = vpop.f32.mrf.mxu0
    %1406 = vmatprep.mubr.f32.mxu0 0.0
    %1407 = vmatmul.mubr.f32.gmra.mxu0 %v1329
    %v1408 = vpop.f32.mrf.mxu0
    %v1409 = vadd.f32 %v1324, %v1408
    %v1410 = vpop.f32.mrf.mxu0
    %1411 = vmatprep.mubr.f32.mxu0 0.0
    %1412 = vmatmul.mubr.f32.gmra.mxu0 %v1332
    %v1413 = vpop.f32.mrf.mxu0
    %v1414 = vadd.f32 %v1324, %v1413
    %v1415 = vpop.f32.mrf.mxu0
    %1416 = vmatprep.mubr.f32.mxu0 0.0
    %1417 = vmatmul.mubr.f32.gmra.mxu0 %v1335
    %v1418 = vpop.f32.mrf.mxu0
    %v1419 = vadd.f32 %v1324, %v1418
    %v1420 = vpop.f32.mrf.mxu0
    %1421 = vdwg.mxu0
    %1422 = vst [vmem:[%s16] sm:$0xff] %v1404
    %1423 = vst [vmem:[%s16 + $0x8] sm:$0xff] %v1409
    %1424 = vst [vmem:[%s16 + $0x10] sm:$0xff] %v1414
    %1425 = vst [vmem:[%s16 + $0x18] sm:$0xff] %v1419
    // Predicated region
    $region82: #{_forward_impl.1} parent=1 // pred_check
      _
    $region83: #{_forward_impl.1} parent=1 // pred_check_branch
      %1427 = sbr.rel (0) target = $region85
    $region84: #{_forward_impl.1} parent=1 // pred_region
      _
    $region85: #{_forward_impl.1} parent=1 // pred_fallthru
      _
    // Predicated region
    $region86: #{_forward_impl.1} parent=1 // pred_check
      _
    $region87: #{_forward_impl.1} parent=1 // pred_check_branch
      %1429 = sbr.rel (0) target = $region89
    $region88: #{_forward_impl.1} parent=1 // pred_region
      _
    $region89: #{_forward_impl.1} parent=1 // pred_fallthru
      _
    %1430 = vsyncpa [#allocation5], 1
    %1431 = vsyncpa [#allocation7], 1
    %1432 = vsyncpa [#allocation10], 1

</llo_original>
